<compile_context>
chip_gen: v7x
topology: tpu7x:2x2x1
jax: 0.10.0
libtpu: 0.0.40
codegen_flags: <defaults>
</compile_context>

<pallas_src>
import math

import jax
import jax.numpy as jnp
from jax.experimental import pallas as pl
from jax.experimental.pallas import tpu as pltpu

B, T, D, H = 2, 8, 32, 8          # batch, seq len, upstream_dim, fusion_heads
HD = D // H                       # head dim
BT = B * T                        # flattened rows
EPS = 1e-5                        # nn.LayerNorm default eps


def _cross_attention_kernel(f1_ref, f2_ref, mask_ref,          # (BT,D),(BT,D),(BT,BT)
                            wq_ref, bq_ref,                     # (D,D) pre-T+scaled, (1,D)
                            wkv_ref, bkv_ref,                   # (D,2D) pre-T fused, (1,2D)
                            wo_ref, bo_ref,                     # (D,D) pre-T, (1,D)
                            gamma_ref, beta_ref,                # (1,D) each
                            out_ref,                            # (BT,D)
                            attn_ref):                          # VMEM scratch (BT,D) f32
    f1 = f1_ref[...]                                            # keys/values/residual
    f2 = f2_ref[...]                                            # queries

    # fused in-projections on pre-transposed / pre-scaled weights (x @ W form)
    q = jnp.dot(f2, wq_ref[...], preferred_element_type=jnp.float32) + bq_ref[...]
    kv = jnp.dot(f1, wkv_ref[...], preferred_element_type=jnp.float32) + bkv_ref[...]
    k = kv[:, :D]
    v = kv[:, D:]

    mask = mask_ref[...]          # additive: 0 (same batch & valid key) / -1e30

    # per-head attention; every head is a single (BT,BT) score matmul covering
    # all batches (batching handled by the precomputed block-diagonal mask).
    for h in range(H):            # static unroll; HD=4 < lane granularity so
        sl = slice(h * HD, (h + 1) * HD)   # per-head split is a static slice
        s = jax.lax.dot_general(q[:, sl], k[:, sl],
                                (((1,), (1,)), ((), ())),       # q @ k^T, no .T
                                preferred_element_type=jnp.float32)
        s = s + mask
        s = s - jnp.max(s, axis=-1, keepdims=True)
        p = jnp.exp(s)
        p = p * pl.reciprocal(jnp.sum(p, axis=-1, keepdims=True), approx=True)
        attn_ref[:, sl] = jnp.dot(p, v[:, sl], preferred_element_type=jnp.float32)

    attn = attn_ref[...]

    # out-projection + residual (residual is features1, per the torch code)
    proj = jnp.dot(attn, wo_ref[...], preferred_element_type=jnp.float32) + bo_ref[...]
    resid = proj + f1

    # LayerNorm over the last dim
    mean = jnp.mean(resid, axis=-1, keepdims=True)
    var = jnp.mean((resid - mean) ** 2, axis=-1, keepdims=True)
    normed = (resid - mean) * jax.lax.rsqrt(var + EPS)
    out_ref[...] = (normed * gamma_ref[...] + beta_ref[...]).astype(out_ref.dtype)


def _full_spec(shape):
    return pl.BlockSpec(shape, lambda *_: (0,) * len(shape))


def cross_attention_fusion(features1, features2, f_lens, params):
    """features1/features2: [B, T, D] padded; f_lens: [B] int32 valid lengths."""
    wq, wk, wv, bq, bk, bv, wo, bo, gamma, beta = params
    scale = 1.0 / math.sqrt(HD)

    # host-side parameter prep (done once, outside the kernel hot path)
    wq_t = (wq * scale).T                               # (D, D), scale folded in
    bq_s = bq * scale                                   # (1, D)
    wkv_t = jnp.concatenate([wk.T, wv.T], axis=1)       # (D, 2D) fused K|V
    bkv = jnp.concatenate([bk, bv], axis=1)             # (1, 2D)
    wo_t = wo.T                                         # (D, D)

    # flatten batch*time into rows for wide lane-friendly matmuls
    f1 = features1.reshape(BT, D)
    f2 = features2.reshape(BT, D)

    # additive attention mask built once on host:
    # allow (query row i, key row j) iff same batch and key position < f_len
    batch_id = jnp.arange(BT, dtype=jnp.int32) // T
    key_pos = jnp.arange(BT, dtype=jnp.int32) % T
    allowed = ((batch_id[:, None] == batch_id[None, :]) &
               (key_pos[None, :] < f_lens[batch_id][None, :]))
    mask_add = jnp.where(allowed, 0.0, -1e30).astype(jnp.float32)   # (BT, BT)

    grid_spec = pltpu.PrefetchScalarGridSpec(
        num_scalar_prefetch=0,
        grid=(1,),                                      # single grid step
        in_specs=[_full_spec((BT, D)), _full_spec((BT, D)), _full_spec((BT, BT)),
                  _full_spec((D, D)), _full_spec((1, D)),
                  _full_spec((D, 2 * D)), _full_spec((1, 2 * D)),
                  _full_spec((D, D)), _full_spec((1, D)),
                  _full_spec((1, D)), _full_spec((1, D))],
        out_specs=_full_spec((BT, D)),
        scratch_shapes=[pltpu.VMEM((BT, D), jnp.float32)],
    )

    out = pl.pallas_call(
        _cross_attention_kernel,
        out_shape=jax.ShapeDtypeStruct((BT, D), jnp.float32),
        grid_spec=grid_spec,
        compiler_params=pltpu.CompilerParams(dimension_semantics=("arbitrary",)),
    )(f1, f2, mask_add, wq_t, bq_s, wkv_t, bkv, wo_t, bo, gamma, beta)

    return out.reshape(B, T, D)


def _reference(features1, features2, f_lens, params):
    """Pure-JAX reference of the same forward (eval-mode MHA + LayerNorm)."""
    wq, wk, wv, bq, bk, bv, wo, bo, gamma, beta = params
    q = features2 @ wq.T + bq[0]
    k = features1 @ wk.T + bk[0]
    v = features1 @ wv.T + bv[0]

    def split(x):  # [B,T,D] -> [B,H,T,HD]
        return x.reshape(B, T, H, HD).transpose(0, 2, 1, 3)

    qh, kh, vh = split(q) / math.sqrt(HD), split(k), split(v)
    s = jnp.einsum("bhqd,bhkd->bhqk", qh, kh)
    key_mask = (jnp.arange(T)[None, :] >= f_lens[:, None])[:, None, None, :]
    s = jnp.where(key_mask, -1e30, s)
    p = jax.nn.softmax(s, axis=-1)
    o = jnp.einsum("bhqk,bhkd->bhqd", p, vh).transpose(0, 2, 1, 3).reshape(B, T, D)
    proj = o @ wo.T + bo[0]
    resid = proj + features1
    mean = resid.mean(-1, keepdims=True)
    var = ((resid - mean) ** 2).mean(-1, keepdims=True)
    return (resid - mean) * jax.lax.rsqrt(var + EPS) * gamma[0] + beta[0]


def _init_params(key):
    keys = jax.random.split(key, 8)
    scale = 1.0 / math.sqrt(D)
    wq = jax.random.uniform(keys[0], (D, D), jnp.float32, -scale, scale)
    wk = jax.random.uniform(keys[1], (D, D), jnp.float32, -scale, scale)
    wv = jax.random.uniform(keys[2], (D, D), jnp.float32, -scale, scale)
    bq = jax.random.uniform(keys[3], (1, D), jnp.float32, -scale, scale)
    bk = jax.random.uniform(keys[4], (1, D), jnp.float32, -scale, scale)
    bv = jax.random.uniform(keys[5], (1, D), jnp.float32, -scale, scale)
    wo = jax.random.uniform(keys[6], (D, D), jnp.float32, -scale, scale)
    bo = jax.random.uniform(keys[7], (1, D), jnp.float32, -scale, scale)
    gamma = jnp.ones((1, D), jnp.float32)
    beta = jnp.zeros((1, D), jnp.float32)
    return (wq, wk, wv, bq, bk, bv, wo, bo, gamma, beta)


if __name__ == "__main__":
    key = jax.random.PRNGKey(0)
    k1, k2, kp = jax.random.split(key, 3)

    # padded feature tensors (as produced by the module's `padding` helper)
    features1 = jax.random.normal(k1, (B, T, D), jnp.float32)
    features2 = jax.random.normal(k2, (B, T, D), jnp.float32)
    f_lens = jnp.array([T, T - 2], dtype=jnp.int32)   # variable valid lengths
    params = _init_params(kp)

    out = cross_attention_fusion(features1, features2, f_lens, params)
    out = jax.block_until_ready(out)

    ref = _reference(features1, features2, f_lens, params)
    # only compare valid (unpadded) query positions, mirroring `tolist(f_lens, features)`
    # tolerance accommodates the approximate EUP reciprocal in the softmax
    for b in range(B):
        n = int(f_lens[b])
        assert jnp.allclose(out[b, :n], ref[b, :n], rtol=5e-3, atol=5e-3)

    print("KERNEL_OK")
</pallas_src>

<mosaic_0001>
module attributes {stable_mosaic.version = 11 : i64} {
  func.func @_cross_attention_kernel(%arg0: i32, %arg1: memref<16x32xf32, #tpu.memory_space<vmem>>, %arg2: memref<16x32xf32, #tpu.memory_space<vmem>>, %arg3: memref<16x16xf32, #tpu.memory_space<vmem>>, %arg4: memref<32x32xf32, #tpu.memory_space<vmem>>, %arg5: memref<1x32xf32, #tpu.memory_space<vmem>>, %arg6: memref<32x64xf32, #tpu.memory_space<vmem>>, %arg7: memref<1x64xf32, #tpu.memory_space<vmem>>, %arg8: memref<32x32xf32, #tpu.memory_space<vmem>>, %arg9: memref<1x32xf32, #tpu.memory_space<vmem>>, %arg10: memref<1x32xf32, #tpu.memory_space<vmem>>, %arg11: memref<1x32xf32, #tpu.memory_space<vmem>>, %arg12: memref<16x32xf32, #tpu.memory_space<vmem>>, %arg13: memref<16x32xf32, #tpu.memory_space<vmem>>) attributes {dimension_semantics = [#tpu.dimension_semantics<arbitrary>], iteration_bounds = array<i64: 1>, scalar_prefetch = 0 : i64, scratch_operands = 1 : i64, tpu.core_type = #tpu.core_type<tc>, window_params = [{pipeline_mode = #tpu.pipeline_mode<synchronous>, transform_indices = @transform_0, window_bounds = array<i64: 16, 32>}, {pipeline_mode = #tpu.pipeline_mode<synchronous>, transform_indices = @transform_1, window_bounds = array<i64: 16, 32>}, {pipeline_mode = #tpu.pipeline_mode<synchronous>, transform_indices = @transform_2, window_bounds = array<i64: 16, 16>}, {pipeline_mode = #tpu.pipeline_mode<synchronous>, transform_indices = @transform_3, window_bounds = array<i64: 32, 32>}, {pipeline_mode = #tpu.pipeline_mode<synchronous>, transform_indices = @transform_4, window_bounds = array<i64: 1, 32>}, {pipeline_mode = #tpu.pipeline_mode<synchronous>, transform_indices = @transform_5, window_bounds = array<i64: 32, 64>}, {pipeline_mode = #tpu.pipeline_mode<synchronous>, transform_indices = @transform_6, window_bounds = array<i64: 1, 64>}, {pipeline_mode = #tpu.pipeline_mode<synchronous>, transform_indices = @transform_7, window_bounds = array<i64: 32, 32>}, {pipeline_mode = #tpu.pipeline_mode<synchronous>, transform_indices = @transform_8, window_bounds = array<i64: 1, 32>}, {pipeline_mode = #tpu.pipeline_mode<synchronous>, transform_indices = @transform_9, window_bounds = array<i64: 1, 32>}, {pipeline_mode = #tpu.pipeline_mode<synchronous>, transform_indices = @transform_10, window_bounds = array<i64: 1, 32>}, {pipeline_mode = #tpu.pipeline_mode<synchronous>, transform_indices = @transform_11, window_bounds = array<i64: 16, 32>}]} {
    %c0 = arith.constant 0 : index
    %c0_0 = arith.constant 0 : index
    %0 = vector.load %arg1[%c0, %c0_0] : memref<16x32xf32, #tpu.memory_space<vmem>>, vector<16x32xf32>
    %c0_1 = arith.constant 0 : index
    %c0_2 = arith.constant 0 : index
    %1 = vector.load %arg2[%c0_1, %c0_2] : memref<16x32xf32, #tpu.memory_space<vmem>>, vector<16x32xf32>
    %c0_3 = arith.constant 0 : index
    %c0_4 = arith.constant 0 : index
    %2 = vector.load %arg4[%c0_3, %c0_4] : memref<32x32xf32, #tpu.memory_space<vmem>>, vector<32x32xf32>
    %cst = arith.constant dense<0.000000e+00> : vector<16x32xf32>
    %3 = tpu.matmul %1, %2, %cst {dimension_numbers = #tpu.dot_dimension_numbers<[1], [0], [0], [1], [0, 0, 1, 1], [], []>} : vector<16x32xf32>, vector<32x32xf32>, vector<16x32xf32> -> vector<16x32xf32>
    %c0_5 = arith.constant 0 : index
    %c0_6 = arith.constant 0 : index
    %4 = vector.load %arg5[%c0_5, %c0_6] : memref<1x32xf32, #tpu.memory_space<vmem>>, vector<1x32xf32>
    %5 = vector.broadcast %4 : vector<1x32xf32> to vector<16x32xf32>
    %6 = arith.addf %3, %5 : vector<16x32xf32>
    %c0_7 = arith.constant 0 : index
    %c0_8 = arith.constant 0 : index
    %7 = vector.load %arg6[%c0_7, %c0_8] : memref<32x64xf32, #tpu.memory_space<vmem>>, vector<32x64xf32>
    %cst_9 = arith.constant dense<0.000000e+00> : vector<16x64xf32>
    %8 = tpu.matmul %0, %7, %cst_9 {dimension_numbers = #tpu.dot_dimension_numbers<[1], [0], [0], [1], [0, 0, 1, 1], [], []>} : vector<16x32xf32>, vector<32x64xf32>, vector<16x64xf32> -> vector<16x64xf32>
    %c0_10 = arith.constant 0 : index
    %c0_11 = arith.constant 0 : index
    %9 = vector.load %arg7[%c0_10, %c0_11] : memref<1x64xf32, #tpu.memory_space<vmem>>, vector<1x64xf32>
    %10 = vector.broadcast %9 : vector<1x64xf32> to vector<16x64xf32>
    %11 = arith.addf %8, %10 : vector<16x64xf32>
    %12 = vector.extract_strided_slice %11 {offsets = [0, 0], sizes = [16, 32], strides = [1, 1]} : vector<16x64xf32> to vector<16x32xf32>
    %13 = vector.extract_strided_slice %11 {offsets = [0, 32], sizes = [16, 32], strides = [1, 1]} : vector<16x64xf32> to vector<16x32xf32>
    %c0_12 = arith.constant 0 : index
    %c0_13 = arith.constant 0 : index
    %14 = vector.load %arg3[%c0_12, %c0_13] : memref<16x16xf32, #tpu.memory_space<vmem>>, vector<16x16xf32>
    %15 = vector.extract_strided_slice %6 {offsets = [0, 0], sizes = [16, 4], strides = [1, 1]} : vector<16x32xf32> to vector<16x4xf32>
    %16 = vector.extract_strided_slice %12 {offsets = [0, 0], sizes = [16, 4], strides = [1, 1]} : vector<16x32xf32> to vector<16x4xf32>
    %cst_14 = arith.constant dense<0.000000e+00> : vector<16x16xf32>
    %17 = tpu.matmul %15, %16, %cst_14 {dimension_numbers = #tpu.dot_dimension_numbers<[1], [1], [0], [0], [0, 0, 1, 0], [], []>} : vector<16x4xf32>, vector<16x4xf32>, vector<16x16xf32> -> vector<16x16xf32>
    %18 = arith.addf %17, %14 : vector<16x16xf32>
    %cst_15 = arith.constant dense<0xFF800000> : vector<16xf32>
    %19 = vector.multi_reduction <maximumf>, %18, %cst_15 [1] : vector<16x16xf32> to vector<16xf32>
    %20 = vector.shape_cast %19 : vector<16xf32> to vector<16x1xf32>
    %21 = vector.broadcast %20 : vector<16x1xf32> to vector<16x16xf32>
    %22 = arith.subf %18, %21 : vector<16x16xf32>
    %23 = math.exp %22 : vector<16x16xf32>
    %cst_16 = arith.constant dense<0.000000e+00> : vector<16xf32>
    %24 = vector.multi_reduction <add>, %23, %cst_16 [1] : vector<16x16xf32> to vector<16xf32>
    %25 = vector.shape_cast %24 : vector<16xf32> to vector<16x1xf32>
    %26 = tpu.reciprocal %25 {approx = true} : vector<16x1xf32> -> vector<16x1xf32>
    %27 = vector.broadcast %26 : vector<16x1xf32> to vector<16x16xf32>
    %28 = arith.mulf %23, %27 : vector<16x16xf32>
    %29 = vector.extract_strided_slice %13 {offsets = [0, 0], sizes = [16, 4], strides = [1, 1]} : vector<16x32xf32> to vector<16x4xf32>
    %cst_17 = arith.constant dense<0.000000e+00> : vector<16x4xf32>
    %30 = tpu.matmul %28, %29, %cst_17 {dimension_numbers = #tpu.dot_dimension_numbers<[1], [0], [0], [1], [0, 0, 1, 1], [], []>} : vector<16x16xf32>, vector<16x4xf32>, vector<16x4xf32> -> vector<16x4xf32>
    %c0_18 = arith.constant 0 : index
    %c0_19 = arith.constant 0 : index
    %31 = vector.load %arg13[%c0_18, %c0_19] : memref<16x32xf32, #tpu.memory_space<vmem>>, vector<16x4xf32>
    tpu.vector_store %arg13[%c0_18, %c0_19], %30 {strides = array<i32>} : memref<16x32xf32, #tpu.memory_space<vmem>>, vector<16x4xf32>,
    %32 = vector.extract_strided_slice %6 {offsets = [0, 4], sizes = [16, 4], strides = [1, 1]} : vector<16x32xf32> to vector<16x4xf32>
    %33 = vector.extract_strided_slice %12 {offsets = [0, 4], sizes = [16, 4], strides = [1, 1]} : vector<16x32xf32> to vector<16x4xf32>
    %cst_20 = arith.constant dense<0.000000e+00> : vector<16x16xf32>
    %34 = tpu.matmul %32, %33, %cst_20 {dimension_numbers = #tpu.dot_dimension_numbers<[1], [1], [0], [0], [0, 0, 1, 0], [], []>} : vector<16x4xf32>, vector<16x4xf32>, vector<16x16xf32> -> vector<16x16xf32>
    %35 = arith.addf %34, %14 : vector<16x16xf32>
    %cst_21 = arith.constant dense<0xFF800000> : vector<16xf32>
    %36 = vector.multi_reduction <maximumf>, %35, %cst_21 [1] : vector<16x16xf32> to vector<16xf32>
    %37 = vector.shape_cast %36 : vector<16xf32> to vector<16x1xf32>
    %38 = vector.broadcast %37 : vector<16x1xf32> to vector<16x16xf32>
    %39 = arith.subf %35, %38 : vector<16x16xf32>
    %40 = math.exp %39 : vector<16x16xf32>
    %cst_22 = arith.constant dense<0.000000e+00> : vector<16xf32>
    %41 = vector.multi_reduction <add>, %40, %cst_22 [1] : vector<16x16xf32> to vector<16xf32>
    %42 = vector.shape_cast %41 : vector<16xf32> to vector<16x1xf32>
    %43 = tpu.reciprocal %42 {approx = true} : vector<16x1xf32> -> vector<16x1xf32>
    %44 = vector.broadcast %43 : vector<16x1xf32> to vector<16x16xf32>
    %45 = arith.mulf %40, %44 : vector<16x16xf32>
    %46 = vector.extract_strided_slice %13 {offsets = [0, 4], sizes = [16, 4], strides = [1, 1]} : vector<16x32xf32> to vector<16x4xf32>
    %cst_23 = arith.constant dense<0.000000e+00> : vector<16x4xf32>
    %47 = tpu.matmul %45, %46, %cst_23 {dimension_numbers = #tpu.dot_dimension_numbers<[1], [0], [0], [1], [0, 0, 1, 1], [], []>} : vector<16x16xf32>, vector<16x4xf32>, vector<16x4xf32> -> vector<16x4xf32>
    %c0_24 = arith.constant 0 : index
    %c4 = arith.constant 4 : index
    %48 = vector.load %arg13[%c0_24, %c4] : memref<16x32xf32, #tpu.memory_space<vmem>>, vector<16x4xf32>
    tpu.vector_store %arg13[%c0_24, %c4], %47 {strides = array<i32>} : memref<16x32xf32, #tpu.memory_space<vmem>>, vector<16x4xf32>,
    %49 = vector.extract_strided_slice %6 {offsets = [0, 8], sizes = [16, 4], strides = [1, 1]} : vector<16x32xf32> to vector<16x4xf32>
    %50 = vector.extract_strided_slice %12 {offsets = [0, 8], sizes = [16, 4], strides = [1, 1]} : vector<16x32xf32> to vector<16x4xf32>
    %cst_25 = arith.constant dense<0.000000e+00> : vector<16x16xf32>
    %51 = tpu.matmul %49, %50, %cst_25 {dimension_numbers = #tpu.dot_dimension_numbers<[1], [1], [0], [0], [0, 0, 1, 0], [], []>} : vector<16x4xf32>, vector<16x4xf32>, vector<16x16xf32> -> vector<16x16xf32>
    %52 = arith.addf %51, %14 : vector<16x16xf32>
    %cst_26 = arith.constant dense<0xFF800000> : vector<16xf32>
    %53 = vector.multi_reduction <maximumf>, %52, %cst_26 [1] : vector<16x16xf32> to vector<16xf32>
    %54 = vector.shape_cast %53 : vector<16xf32> to vector<16x1xf32>
    %55 = vector.broadcast %54 : vector<16x1xf32> to vector<16x16xf32>
    %56 = arith.subf %52, %55 : vector<16x16xf32>
    %57 = math.exp %56 : vector<16x16xf32>
    %cst_27 = arith.constant dense<0.000000e+00> : vector<16xf32>
    %58 = vector.multi_reduction <add>, %57, %cst_27 [1] : vector<16x16xf32> to vector<16xf32>
    %59 = vector.shape_cast %58 : vector<16xf32> to vector<16x1xf32>
    %60 = tpu.reciprocal %59 {approx = true} : vector<16x1xf32> -> vector<16x1xf32>
    %61 = vector.broadcast %60 : vector<16x1xf32> to vector<16x16xf32>
    %62 = arith.mulf %57, %61 : vector<16x16xf32>
    %63 = vector.extract_strided_slice %13 {offsets = [0, 8], sizes = [16, 4], strides = [1, 1]} : vector<16x32xf32> to vector<16x4xf32>
    %cst_28 = arith.constant dense<0.000000e+00> : vector<16x4xf32>
    %64 = tpu.matmul %62, %63, %cst_28 {dimension_numbers = #tpu.dot_dimension_numbers<[1], [0], [0], [1], [0, 0, 1, 1], [], []>} : vector<16x16xf32>, vector<16x4xf32>, vector<16x4xf32> -> vector<16x4xf32>
    %c0_29 = arith.constant 0 : index
    %c8 = arith.constant 8 : index
    %65 = vector.load %arg13[%c0_29, %c8] : memref<16x32xf32, #tpu.memory_space<vmem>>, vector<16x4xf32>
    tpu.vector_store %arg13[%c0_29, %c8], %64 {strides = array<i32>} : memref<16x32xf32, #tpu.memory_space<vmem>>, vector<16x4xf32>,
    %66 = vector.extract_strided_slice %6 {offsets = [0, 12], sizes = [16, 4], strides = [1, 1]} : vector<16x32xf32> to vector<16x4xf32>
    %67 = vector.extract_strided_slice %12 {offsets = [0, 12], sizes = [16, 4], strides = [1, 1]} : vector<16x32xf32> to vector<16x4xf32>
    %cst_30 = arith.constant dense<0.000000e+00> : vector<16x16xf32>
    %68 = tpu.matmul %66, %67, %cst_30 {dimension_numbers = #tpu.dot_dimension_numbers<[1], [1], [0], [0], [0, 0, 1, 0], [], []>} : vector<16x4xf32>, vector<16x4xf32>, vector<16x16xf32> -> vector<16x16xf32>
    %69 = arith.addf %68, %14 : vector<16x16xf32>
    %cst_31 = arith.constant dense<0xFF800000> : vector<16xf32>
    %70 = vector.multi_reduction <maximumf>, %69, %cst_31 [1] : vector<16x16xf32> to vector<16xf32>
    %71 = vector.shape_cast %70 : vector<16xf32> to vector<16x1xf32>
    %72 = vector.broadcast %71 : vector<16x1xf32> to vector<16x16xf32>
    %73 = arith.subf %69, %72 : vector<16x16xf32>
    %74 = math.exp %73 : vector<16x16xf32>
    %cst_32 = arith.constant dense<0.000000e+00> : vector<16xf32>
    %75 = vector.multi_reduction <add>, %74, %cst_32 [1] : vector<16x16xf32> to vector<16xf32>
    %76 = vector.shape_cast %75 : vector<16xf32> to vector<16x1xf32>
    %77 = tpu.reciprocal %76 {approx = true} : vector<16x1xf32> -> vector<16x1xf32>
    %78 = vector.broadcast %77 : vector<16x1xf32> to vector<16x16xf32>
    %79 = arith.mulf %74, %78 : vector<16x16xf32>
    %80 = vector.extract_strided_slice %13 {offsets = [0, 12], sizes = [16, 4], strides = [1, 1]} : vector<16x32xf32> to vector<16x4xf32>
    %cst_33 = arith.constant dense<0.000000e+00> : vector<16x4xf32>
    %81 = tpu.matmul %79, %80, %cst_33 {dimension_numbers = #tpu.dot_dimension_numbers<[1], [0], [0], [1], [0, 0, 1, 1], [], []>} : vector<16x16xf32>, vector<16x4xf32>, vector<16x4xf32> -> vector<16x4xf32>
    %c0_34 = arith.constant 0 : index
    %c12 = arith.constant 12 : index
    %82 = vector.load %arg13[%c0_34, %c12] : memref<16x32xf32, #tpu.memory_space<vmem>>, vector<16x4xf32>
    tpu.vector_store %arg13[%c0_34, %c12], %81 {strides = array<i32>} : memref<16x32xf32, #tpu.memory_space<vmem>>, vector<16x4xf32>,
    %83 = vector.extract_strided_slice %6 {offsets = [0, 16], sizes = [16, 4], strides = [1, 1]} : vector<16x32xf32> to vector<16x4xf32>
    %84 = vector.extract_strided_slice %12 {offsets = [0, 16], sizes = [16, 4], strides = [1, 1]} : vector<16x32xf32> to vector<16x4xf32>
    %cst_35 = arith.constant dense<0.000000e+00> : vector<16x16xf32>
    %85 = tpu.matmul %83, %84, %cst_35 {dimension_numbers = #tpu.dot_dimension_numbers<[1], [1], [0], [0], [0, 0, 1, 0], [], []>} : vector<16x4xf32>, vector<16x4xf32>, vector<16x16xf32> -> vector<16x16xf32>
    %86 = arith.addf %85, %14 : vector<16x16xf32>
    %cst_36 = arith.constant dense<0xFF800000> : vector<16xf32>
    %87 = vector.multi_reduction <maximumf>, %86, %cst_36 [1] : vector<16x16xf32> to vector<16xf32>
    %88 = vector.shape_cast %87 : vector<16xf32> to vector<16x1xf32>
    %89 = vector.broadcast %88 : vector<16x1xf32> to vector<16x16xf32>
    %90 = arith.subf %86, %89 : vector<16x16xf32>
    %91 = math.exp %90 : vector<16x16xf32>
    %cst_37 = arith.constant dense<0.000000e+00> : vector<16xf32>
    %92 = vector.multi_reduction <add>, %91, %cst_37 [1] : vector<16x16xf32> to vector<16xf32>
    %93 = vector.shape_cast %92 : vector<16xf32> to vector<16x1xf32>
    %94 = tpu.reciprocal %93 {approx = true} : vector<16x1xf32> -> vector<16x1xf32>
    %95 = vector.broadcast %94 : vector<16x1xf32> to vector<16x16xf32>
    %96 = arith.mulf %91, %95 : vector<16x16xf32>
    %97 = vector.extract_strided_slice %13 {offsets = [0, 16], sizes = [16, 4], strides = [1, 1]} : vector<16x32xf32> to vector<16x4xf32>
    %cst_38 = arith.constant dense<0.000000e+00> : vector<16x4xf32>
    %98 = tpu.matmul %96, %97, %cst_38 {dimension_numbers = #tpu.dot_dimension_numbers<[1], [0], [0], [1], [0, 0, 1, 1], [], []>} : vector<16x16xf32>, vector<16x4xf32>, vector<16x4xf32> -> vector<16x4xf32>
    %c0_39 = arith.constant 0 : index
    %c16 = arith.constant 16 : index
    %99 = vector.load %arg13[%c0_39, %c16] : memref<16x32xf32, #tpu.memory_space<vmem>>, vector<16x4xf32>
    tpu.vector_store %arg13[%c0_39, %c16], %98 {strides = array<i32>} : memref<16x32xf32, #tpu.memory_space<vmem>>, vector<16x4xf32>,
    %100 = vector.extract_strided_slice %6 {offsets = [0, 20], sizes = [16, 4], strides = [1, 1]} : vector<16x32xf32> to vector<16x4xf32>
    %101 = vector.extract_strided_slice %12 {offsets = [0, 20], sizes = [16, 4], strides = [1, 1]} : vector<16x32xf32> to vector<16x4xf32>
    %cst_40 = arith.constant dense<0.000000e+00> : vector<16x16xf32>
    %102 = tpu.matmul %100, %101, %cst_40 {dimension_numbers = #tpu.dot_dimension_numbers<[1], [1], [0], [0], [0, 0, 1, 0], [], []>} : vector<16x4xf32>, vector<16x4xf32>, vector<16x16xf32> -> vector<16x16xf32>
    %103 = arith.addf %102, %14 : vector<16x16xf32>
    %cst_41 = arith.constant dense<0xFF800000> : vector<16xf32>
    %104 = vector.multi_reduction <maximumf>, %103, %cst_41 [1] : vector<16x16xf32> to vector<16xf32>
    %105 = vector.shape_cast %104 : vector<16xf32> to vector<16x1xf32>
    %106 = vector.broadcast %105 : vector<16x1xf32> to vector<16x16xf32>
    %107 = arith.subf %103, %106 : vector<16x16xf32>
    %108 = math.exp %107 : vector<16x16xf32>
    %cst_42 = arith.constant dense<0.000000e+00> : vector<16xf32>
    %109 = vector.multi_reduction <add>, %108, %cst_42 [1] : vector<16x16xf32> to vector<16xf32>
    %110 = vector.shape_cast %109 : vector<16xf32> to vector<16x1xf32>
    %111 = tpu.reciprocal %110 {approx = true} : vector<16x1xf32> -> vector<16x1xf32>
    %112 = vector.broadcast %111 : vector<16x1xf32> to vector<16x16xf32>
    %113 = arith.mulf %108, %112 : vector<16x16xf32>
    %114 = vector.extract_strided_slice %13 {offsets = [0, 20], sizes = [16, 4], strides = [1, 1]} : vector<16x32xf32> to vector<16x4xf32>
    %cst_43 = arith.constant dense<0.000000e+00> : vector<16x4xf32>
    %115 = tpu.matmul %113, %114, %cst_43 {dimension_numbers = #tpu.dot_dimension_numbers<[1], [0], [0], [1], [0, 0, 1, 1], [], []>} : vector<16x16xf32>, vector<16x4xf32>, vector<16x4xf32> -> vector<16x4xf32>
    %c0_44 = arith.constant 0 : index
    %c20 = arith.constant 20 : index
    %116 = vector.load %arg13[%c0_44, %c20] : memref<16x32xf32, #tpu.memory_space<vmem>>, vector<16x4xf32>
    tpu.vector_store %arg13[%c0_44, %c20], %115 {strides = array<i32>} : memref<16x32xf32, #tpu.memory_space<vmem>>, vector<16x4xf32>,
    %117 = vector.extract_strided_slice %6 {offsets = [0, 24], sizes = [16, 4], strides = [1, 1]} : vector<16x32xf32> to vector<16x4xf32>
    %118 = vector.extract_strided_slice %12 {offsets = [0, 24], sizes = [16, 4], strides = [1, 1]} : vector<16x32xf32> to vector<16x4xf32>
    %cst_45 = arith.constant dense<0.000000e+00> : vector<16x16xf32>
    %119 = tpu.matmul %117, %118, %cst_45 {dimension_numbers = #tpu.dot_dimension_numbers<[1], [1], [0], [0], [0, 0, 1, 0], [], []>} : vector<16x4xf32>, vector<16x4xf32>, vector<16x16xf32> -> vector<16x16xf32>
    %120 = arith.addf %119, %14 : vector<16x16xf32>
    %cst_46 = arith.constant dense<0xFF800000> : vector<16xf32>
    %121 = vector.multi_reduction <maximumf>, %120, %cst_46 [1] : vector<16x16xf32> to vector<16xf32>
    %122 = vector.shape_cast %121 : vector<16xf32> to vector<16x1xf32>
    %123 = vector.broadcast %122 : vector<16x1xf32> to vector<16x16xf32>
    %124 = arith.subf %120, %123 : vector<16x16xf32>
    %125 = math.exp %124 : vector<16x16xf32>
    %cst_47 = arith.constant dense<0.000000e+00> : vector<16xf32>
    %126 = vector.multi_reduction <add>, %125, %cst_47 [1] : vector<16x16xf32> to vector<16xf32>
    %127 = vector.shape_cast %126 : vector<16xf32> to vector<16x1xf32>
    %128 = tpu.reciprocal %127 {approx = true} : vector<16x1xf32> -> vector<16x1xf32>
    %129 = vector.broadcast %128 : vector<16x1xf32> to vector<16x16xf32>
    %130 = arith.mulf %125, %129 : vector<16x16xf32>
    %131 = vector.extract_strided_slice %13 {offsets = [0, 24], sizes = [16, 4], strides = [1, 1]} : vector<16x32xf32> to vector<16x4xf32>
    %cst_48 = arith.constant dense<0.000000e+00> : vector<16x4xf32>
    %132 = tpu.matmul %130, %131, %cst_48 {dimension_numbers = #tpu.dot_dimension_numbers<[1], [0], [0], [1], [0, 0, 1, 1], [], []>} : vector<16x16xf32>, vector<16x4xf32>, vector<16x4xf32> -> vector<16x4xf32>
    %c0_49 = arith.constant 0 : index
    %c24 = arith.constant 24 : index
    %133 = vector.load %arg13[%c0_49, %c24] : memref<16x32xf32, #tpu.memory_space<vmem>>, vector<16x4xf32>
    tpu.vector_store %arg13[%c0_49, %c24], %132 {strides = array<i32>} : memref<16x32xf32, #tpu.memory_space<vmem>>, vector<16x4xf32>,
    %134 = vector.extract_strided_slice %6 {offsets = [0, 28], sizes = [16, 4], strides = [1, 1]} : vector<16x32xf32> to vector<16x4xf32>
    %135 = vector.extract_strided_slice %12 {offsets = [0, 28], sizes = [16, 4], strides = [1, 1]} : vector<16x32xf32> to vector<16x4xf32>
    %cst_50 = arith.constant dense<0.000000e+00> : vector<16x16xf32>
    %136 = tpu.matmul %134, %135, %cst_50 {dimension_numbers = #tpu.dot_dimension_numbers<[1], [1], [0], [0], [0, 0, 1, 0], [], []>} : vector<16x4xf32>, vector<16x4xf32>, vector<16x16xf32> -> vector<16x16xf32>
    %137 = arith.addf %136, %14 : vector<16x16xf32>
    %cst_51 = arith.constant dense<0xFF800000> : vector<16xf32>
    %138 = vector.multi_reduction <maximumf>, %137, %cst_51 [1] : vector<16x16xf32> to vector<16xf32>
    %139 = vector.shape_cast %138 : vector<16xf32> to vector<16x1xf32>
    %140 = vector.broadcast %139 : vector<16x1xf32> to vector<16x16xf32>
    %141 = arith.subf %137, %140 : vector<16x16xf32>
    %142 = math.exp %141 : vector<16x16xf32>
    %cst_52 = arith.constant dense<0.000000e+00> : vector<16xf32>
    %143 = vector.multi_reduction <add>, %142, %cst_52 [1] : vector<16x16xf32> to vector<16xf32>
    %144 = vector.shape_cast %143 : vector<16xf32> to vector<16x1xf32>
    %145 = tpu.reciprocal %144 {approx = true} : vector<16x1xf32> -> vector<16x1xf32>
    %146 = vector.broadcast %145 : vector<16x1xf32> to vector<16x16xf32>
    %147 = arith.mulf %142, %146 : vector<16x16xf32>
    %148 = vector.extract_strided_slice %13 {offsets = [0, 28], sizes = [16, 4], strides = [1, 1]} : vector<16x32xf32> to vector<16x4xf32>
    %cst_53 = arith.constant dense<0.000000e+00> : vector<16x4xf32>
    %149 = tpu.matmul %147, %148, %cst_53 {dimension_numbers = #tpu.dot_dimension_numbers<[1], [0], [0], [1], [0, 0, 1, 1], [], []>} : vector<16x16xf32>, vector<16x4xf32>, vector<16x4xf32> -> vector<16x4xf32>
    %c0_54 = arith.constant 0 : index
    %c28 = arith.constant 28 : index
    %150 = vector.load %arg13[%c0_54, %c28] : memref<16x32xf32, #tpu.memory_space<vmem>>, vector<16x4xf32>
    tpu.vector_store %arg13[%c0_54, %c28], %149 {strides = array<i32>} : memref<16x32xf32, #tpu.memory_space<vmem>>, vector<16x4xf32>,
    %c0_55 = arith.constant 0 : index
    %c0_56 = arith.constant 0 : index
    %151 = vector.load %arg13[%c0_55, %c0_56] : memref<16x32xf32, #tpu.memory_space<vmem>>, vector<16x32xf32>
    %c0_57 = arith.constant 0 : index
    %c0_58 = arith.constant 0 : index
    %152 = vector.load %arg8[%c0_57, %c0_58] : memref<32x32xf32, #tpu.memory_space<vmem>>, vector<32x32xf32>
    %cst_59 = arith.constant dense<0.000000e+00> : vector<16x32xf32>
    %153 = tpu.matmul %151, %152, %cst_59 {dimension_numbers = #tpu.dot_dimension_numbers<[1], [0], [0], [1], [0, 0, 1, 1], [], []>} : vector<16x32xf32>, vector<32x32xf32>, vector<16x32xf32> -> vector<16x32xf32>
    %c0_60 = arith.constant 0 : index
    %c0_61 = arith.constant 0 : index
    %154 = vector.load %arg9[%c0_60, %c0_61] : memref<1x32xf32, #tpu.memory_space<vmem>>, vector<1x32xf32>
    %155 = vector.broadcast %154 : vector<1x32xf32> to vector<16x32xf32>
    %156 = arith.addf %153, %155 : vector<16x32xf32>
    %157 = arith.addf %156, %0 : vector<16x32xf32>
    %cst_62 = arith.constant dense<0.000000e+00> : vector<16xf32>
    %158 = vector.multi_reduction <add>, %157, %cst_62 [1] : vector<16x32xf32> to vector<16xf32>
    %159 = vector.shape_cast %158 : vector<16xf32> to vector<16x1xf32>
    %cst_63 = arith.constant 3.200000e+01 : f32
    %160 = vector.broadcast %cst_63 : f32 to vector<16x1xf32>
    %161 = arith.divf %159, %160 : vector<16x1xf32>
    %162 = vector.broadcast %161 : vector<16x1xf32> to vector<16x32xf32>
    %163 = arith.subf %157, %162 : vector<16x32xf32>
    %164 = arith.mulf %163, %163 : vector<16x32xf32>
    %cst_64 = arith.constant dense<0.000000e+00> : vector<16xf32>
    %165 = vector.multi_reduction <add>, %164, %cst_64 [1] : vector<16x32xf32> to vector<16xf32>
    %166 = vector.shape_cast %165 : vector<16xf32> to vector<16x1xf32>
    %cst_65 = arith.constant 3.200000e+01 : f32
    %167 = vector.broadcast %cst_65 : f32 to vector<16x1xf32>
    %168 = arith.divf %166, %167 : vector<16x1xf32>
    %169 = vector.broadcast %161 : vector<16x1xf32> to vector<16x32xf32>
    %170 = arith.subf %157, %169 : vector<16x32xf32>
    %cst_66 = arith.constant 9.99999974E-6 : f32
    %171 = vector.broadcast %cst_66 : f32 to vector<16x1xf32>
    %172 = arith.addf %168, %171 : vector<16x1xf32>
    %173 = math.rsqrt %172 : vector<16x1xf32>
    %174 = vector.broadcast %173 : vector<16x1xf32> to vector<16x32xf32>
    %175 = arith.mulf %170, %174 : vector<16x32xf32>
    %c0_67 = arith.constant 0 : index
    %c0_68 = arith.constant 0 : index
    %176 = vector.load %arg10[%c0_67, %c0_68] : memref<1x32xf32, #tpu.memory_space<vmem>>, vector<1x32xf32>
    %177 = vector.broadcast %176 : vector<1x32xf32> to vector<16x32xf32>
    %178 = arith.mulf %175, %177 : vector<16x32xf32>
    %c0_69 = arith.constant 0 : index
    %c0_70 = arith.constant 0 : index
    %179 = vector.load %arg11[%c0_69, %c0_70] : memref<1x32xf32, #tpu.memory_space<vmem>>, vector<1x32xf32>
    %180 = vector.broadcast %179 : vector<1x32xf32> to vector<16x32xf32>
    %181 = arith.addf %178, %180 : vector<16x32xf32>
    %c0_71 = arith.constant 0 : index
    %c0_72 = arith.constant 0 : index
    %182 = vector.load %arg12[%c0_71, %c0_72] : memref<16x32xf32, #tpu.memory_space<vmem>>, vector<16x32xf32>
    tpu.vector_store %arg12[%c0_71, %c0_72], %181 {strides = array<i32>} : memref<16x32xf32, #tpu.memory_space<vmem>>, vector<16x32xf32>,
    return
  }
  func.func @transform_0(%arg0: i32) -> (i32, i32) {
    %c0_i32 = arith.constant 0 : i32
    %c0_i32_0 = arith.constant 0 : i32
    %c0_i32_1 = arith.constant 0 : i32
    return %c0_i32, %c0_i32_0 : i32, i32
  }
  func.func @transform_1(%arg0: i32) -> (i32, i32) {
    %c0_i32 = arith.constant 0 : i32
    %c0_i32_0 = arith.constant 0 : i32
    %c0_i32_1 = arith.constant 0 : i32
    return %c0_i32, %c0_i32_0 : i32, i32
  }
  func.func @transform_2(%arg0: i32) -> (i32, i32) {
    %c0_i32 = arith.constant 0 : i32
    %c0_i32_0 = arith.constant 0 : i32
    %c0_i32_1 = arith.constant 0 : i32
    return %c0_i32, %c0_i32_0 : i32, i32
  }
  func.func @transform_3(%arg0: i32) -> (i32, i32) {
    %c0_i32 = arith.constant 0 : i32
    %c0_i32_0 = arith.constant 0 : i32
    %c0_i32_1 = arith.constant 0 : i32
    return %c0_i32, %c0_i32_0 : i32, i32
  }
  func.func @transform_4(%arg0: i32) -> (i32, i32) {
    %c0_i32 = arith.constant 0 : i32
    %c0_i32_0 = arith.constant 0 : i32
    %c0_i32_1 = arith.constant 0 : i32
    return %c0_i32, %c0_i32_0 : i32, i32
  }
  func.func @transform_5(%arg0: i32) -> (i32, i32) {
    %c0_i32 = arith.constant 0 : i32
    %c0_i32_0 = arith.constant 0 : i32
    %c0_i32_1 = arith.constant 0 : i32
    return %c0_i32, %c0_i32_0 : i32, i32
  }
  func.func @transform_6(%arg0: i32) -> (i32, i32) {
    %c0_i32 = arith.constant 0 : i32
    %c0_i32_0 = arith.constant 0 : i32
    %c0_i32_1 = arith.constant 0 : i32
    return %c0_i32, %c0_i32_0 : i32, i32
  }
  func.func @transform_7(%arg0: i32) -> (i32, i32) {
    %c0_i32 = arith.constant 0 : i32
    %c0_i32_0 = arith.constant 0 : i32
    %c0_i32_1 = arith.constant 0 : i32
    return %c0_i32, %c0_i32_0 : i32, i32
  }
  func.func @transform_8(%arg0: i32) -> (i32, i32) {
    %c0_i32 = arith.constant 0 : i32
    %c0_i32_0 = arith.constant 0 : i32
    %c0_i32_1 = arith.constant 0 : i32
    return %c0_i32, %c0_i32_0 : i32, i32
  }
  func.func @transform_9(%arg0: i32) -> (i32, i32) {
    %c0_i32 = arith.constant 0 : i32
    %c0_i32_0 = arith.constant 0 : i32
    %c0_i32_1 = arith.constant 0 : i32
    return %c0_i32, %c0_i32_0 : i32, i32
  }
  func.func @transform_10(%arg0: i32) -> (i32, i32) {
    %c0_i32 = arith.constant 0 : i32
    %c0_i32_0 = arith.constant 0 : i32
    %c0_i32_1 = arith.constant 0 : i32
    return %c0_i32, %c0_i32_0 : i32, i32
  }
  func.func @transform_11(%arg0: i32) -> (i32, i32) {
    %c0_i32 = arith.constant 0 : i32
    %c0_i32_0 = arith.constant 0 : i32
    %c0_i32_1 = arith.constant 0 : i32
    return %c0_i32, %c0_i32_0 : i32, i32
  }
}

</mosaic_0001>

<llo_original>
// kernel: tpu_custom_call.1
$region0: #{tpu_custom_call.1}
  #allocation0 [shape = 'u32[]', space=smem, size = 0x4, offset = 0x4, fixed_abs, tag = 'smem constant byte address 0x4 - core index']
  #allocation1 [shape = 'u32[144,128]{1,0:T(1,128)}', space=vmem, size = 0x12000, scoped, tag = 'internal scratch']
  #allocation2 [shape = 'f32[16,32]{1,0:T(8,128)}', space=vmem, size = 0x2000, scoped, tag = 'scratch operand']
  %s0 = inlined_call_operand.hbm [shape: f32[16,32], index: 0, kind: input, shape index: {}]
  %s1 = inlined_call_operand.hbm [shape: f32[16,32], index: 1, kind: input, shape index: {}]
  %s2 = inlined_call_operand.hbm [shape: f32[16,16], index: 2, kind: input, shape index: {}]
  %s3 = inlined_call_operand.hbm [shape: f32[32,32], index: 3, kind: input, shape index: {}]
  %s4 = inlined_call_operand.vmem [shape: f32[1,32], index: 4, kind: input, shape index: {}]
  %s5 = inlined_call_operand.hbm [shape: f32[32,64], index: 5, kind: input, shape index: {}]
  %s6 = inlined_call_operand.vmem [shape: f32[1,64], index: 6, kind: input, shape index: {}]
  %s7 = inlined_call_operand.hbm [shape: f32[32,32], index: 7, kind: input, shape index: {}]
  %s8 = inlined_call_operand.vmem [shape: f32[1,32], index: 8, kind: input, shape index: {}]
  %s9 = inlined_call_operand.vmem [shape: f32[1,32], index: 9, kind: input, shape index: {}]
  %s10 = inlined_call_operand.vmem [shape: f32[1,32], index: 10, kind: input, shape index: {}]
  %s11 = inlined_call_operand.hbm [shape: f32[16,32], index: 11, kind: output, shape index: {}]
  %s12 = sld [smem:[#allocation0]]
  $region78: #{tpu_custom_call.1} parent=0
    _
  %s14 = ssub.s32 1, %s12
  %s15 = scalar_select 0, %s14, %s12
  $region1: #{tpu_custom_call.1} parent=0
    #allocation3 [shape = 'u8[8192]{0}', space=vmem, size = 0x2000, scoped, tag = 'input window, operand 0, single buffered']
    #allocation4 [shape = 's32[1]{0}', space=sflag, size = 0x4, scoped, tag = 'scoped memory for tpu_custom_call.1']
    #allocation5 [shape = 's32[1]{0}', space=sflag, size = 0x4, scoped, tag = 'scoped memory for tpu_custom_call.1']
    #allocation6 [shape = 'u8[8192]{0}', space=vmem, size = 0x2000, scoped, tag = 'input window, operand 1, single buffered']
    #allocation7 [shape = 's32[1]{0}', space=sflag, size = 0x4, scoped, tag = 'scoped memory for tpu_custom_call.1']
    #allocation8 [shape = 'u8[8192]{0}', space=vmem, size = 0x2000, scoped, tag = 'input window, operand 2, single buffered']
    #allocation9 [shape = 'u8[16384]{0}', space=vmem, size = 0x4000, scoped, tag = 'input window, operand 3, single buffered']
    #allocation10 [shape = 's32[1]{0}', space=sflag, size = 0x4, scoped, tag = 'scoped memory for tpu_custom_call.1']
    #allocation11 [shape = 'u8[16384]{0}', space=vmem, size = 0x4000, scoped, tag = 'input window, operand 5, single buffered']
    #allocation12 [shape = 'u8[16384]{0}', space=vmem, size = 0x4000, scoped, tag = 'input window, operand 7, single buffered']
    #allocation13 [shape = 's32[1]{0}', space=sflag, size = 0x4, scoped, tag = 'scoped memory for tpu_custom_call.1']
    #allocation14 [shape = 'u8[8192]{0}', space=vmem, size = 0x2000, scoped, tag = 'output window, operand 0, single buffered']
    %16 = vsyncpa [#allocation4], 0
    %17 = vsyncpa [#allocation7], 0
    %18 = vsyncpa [#allocation10], 0
    %19 = vsyncpa [#allocation13], 0
    %20 = vsyncpa [#allocation5], 0
    // Predicated region
    $region2: #{tpu_custom_call.1} parent=1 // pred_check
      _
    $region3: #{tpu_custom_call.1} parent=1 // pred_check_branch
      %22 = sbr.rel (0) target = $region5
    $region4: #{tpu_custom_call.1} parent=1 // pred_region
      %s24 = ssub.s32 256, 256
      %25 = vsyncadd [#allocation4], %s24
      %s26 = sshll.u32 [#allocation3], 4
      %s27 = int_to_ptr.vmem [resolvable:$true] %s26
      %32 = dma.hbm_to_vmem [thread:$0]  %s0, 256, %s27, [#allocation4], 128, 128, 8
    $region5: #{tpu_custom_call.1} parent=1 // pred_fallthru
      _
    // Predicated region
    $region6: #{tpu_custom_call.1} parent=1 // pred_check
      _
    $region7: #{tpu_custom_call.1} parent=1 // pred_check_branch
      %34 = sbr.rel (0) target = $region9
    $region8: #{tpu_custom_call.1} parent=1 // pred_region
      %s36 = ssub.s32 256, 256
      %37 = vsyncadd [#allocation7], %s36
      %s38 = sshll.u32 [#allocation6], 4
      %s39 = int_to_ptr.vmem [resolvable:$true] %s38
      %44 = dma.hbm_to_vmem [thread:$0]  %s1, 256, %s39, [#allocation7], 128, 128, 8
    $region9: #{tpu_custom_call.1} parent=1 // pred_fallthru
      _
    // Predicated region
    $region10: #{tpu_custom_call.1} parent=1 // pred_check
      _
    $region11: #{tpu_custom_call.1} parent=1 // pred_check_branch
      %46 = sbr.rel (0) target = $region13
    $region12: #{tpu_custom_call.1} parent=1 // pred_region
      %s48 = ssub.s32 256, 256
      %49 = vsyncadd [#allocation7], %s48
      %s50 = sshll.u32 [#allocation8], 4
      %s51 = int_to_ptr.vmem [resolvable:$true] %s50
      %56 = dma.hbm_to_vmem [thread:$0]  %s2, 256, %s51, [#allocation7], 128, 128, 8
    $region13: #{tpu_custom_call.1} parent=1 // pred_fallthru
      _
    // Predicated region
    $region14: #{tpu_custom_call.1} parent=1 // pred_check
      _
    $region15: #{tpu_custom_call.1} parent=1 // pred_check_branch
      %58 = sbr.rel (0) target = $region17
    $region16: #{tpu_custom_call.1} parent=1 // pred_region
      %s60 = ssub.s32 512, 512
      %61 = vsyncadd [#allocation10], %s60
      %s62 = sshll.u32 [#allocation9], 4
      %s63 = int_to_ptr.vmem [resolvable:$true] %s62
      %68 = dma.hbm_to_vmem [thread:$0]  %s3, 512, %s63, [#allocation10], 128, 128, 8
    $region17: #{tpu_custom_call.1} parent=1 // pred_fallthru
      _
    // Predicated region
    $region18: #{tpu_custom_call.1} parent=1 // pred_check
      _
    $region19: #{tpu_custom_call.1} parent=1 // pred_check_branch
      %70 = sbr.rel (0) target = $region21
    $region20: #{tpu_custom_call.1} parent=1 // pred_region
      _
    $region21: #{tpu_custom_call.1} parent=1 // pred_fallthru
      _
    // Predicated region
    $region22: #{tpu_custom_call.1} parent=1 // pred_check
      _
    $region23: #{tpu_custom_call.1} parent=1 // pred_check_branch
      %72 = sbr.rel (0) target = $region25
    $region24: #{tpu_custom_call.1} parent=1 // pred_region
      %s74 = ssub.s32 512, 512
      %75 = vsyncadd [#allocation10], %s74
      %s76 = sshll.u32 [#allocation11], 4
      %s77 = int_to_ptr.vmem [resolvable:$true] %s76
      %82 = dma.hbm_to_vmem [thread:$0]  %s5, 512, %s77, [#allocation10], 128, 128, 8
    $region25: #{tpu_custom_call.1} parent=1 // pred_fallthru
      _
    // Predicated region
    $region26: #{tpu_custom_call.1} parent=1 // pred_check
      _
    $region27: #{tpu_custom_call.1} parent=1 // pred_check_branch
      %84 = sbr.rel (0) target = $region29
    $region28: #{tpu_custom_call.1} parent=1 // pred_region
      _
    $region29: #{tpu_custom_call.1} parent=1 // pred_fallthru
      _
    // Predicated region
    $region30: #{tpu_custom_call.1} parent=1 // pred_check
      _
    $region31: #{tpu_custom_call.1} parent=1 // pred_check_branch
      %86 = sbr.rel (0) target = $region33
    $region32: #{tpu_custom_call.1} parent=1 // pred_region
      %s88 = ssub.s32 512, 512
      %89 = vsyncadd [#allocation13], %s88
      %s90 = sshll.u32 [#allocation12], 4
      %s91 = int_to_ptr.vmem [resolvable:$true] %s90
      %96 = dma.hbm_to_vmem [thread:$0]  %s7, 512, %s91, [#allocation13], 128, 128, 8
    $region33: #{tpu_custom_call.1} parent=1 // pred_fallthru
      _
    // Predicated region
    $region34: #{tpu_custom_call.1} parent=1 // pred_check
      _
    $region35: #{tpu_custom_call.1} parent=1 // pred_check_branch
      %98 = sbr.rel (0) target = $region37
    $region36: #{tpu_custom_call.1} parent=1 // pred_region
      _
    $region37: #{tpu_custom_call.1} parent=1 // pred_fallthru
      _
    // Predicated region
    $region38: #{tpu_custom_call.1} parent=1 // pred_check
      _
    $region39: #{tpu_custom_call.1} parent=1 // pred_check_branch
      %100 = sbr.rel (0) target = $region41
    $region40: #{tpu_custom_call.1} parent=1 // pred_region
      _
    $region41: #{tpu_custom_call.1} parent=1 // pred_fallthru
      _
    // Predicated region
    $region42: #{tpu_custom_call.1} parent=1 // pred_check
      _
    $region43: #{tpu_custom_call.1} parent=1 // pred_check_branch
      %102 = sbr.rel (0) target = $region45
    $region44: #{tpu_custom_call.1} parent=1 // pred_region
      _
    $region45: #{tpu_custom_call.1} parent=1 // pred_fallthru
      _
    // Predicated region
    $region46: #{tpu_custom_call.1} parent=1 // pred_check
      _
    $region47: #{tpu_custom_call.1} parent=1 // pred_check_branch
      %104 = sbr.rel (0) target = $region49
    $region48: #{tpu_custom_call.1} parent=1 // pred_region
      %105 = dma.done [#allocation4], 256
    $region49: #{tpu_custom_call.1} parent=1 // pred_fallthru
      _
    // Predicated region
    $region50: #{tpu_custom_call.1} parent=1 // pred_check
      _
    $region51: #{tpu_custom_call.1} parent=1 // pred_check_branch
      %107 = sbr.rel (0) target = $region53
    $region52: #{tpu_custom_call.1} parent=1 // pred_region
      %108 = dma.done [#allocation7], 256
    $region53: #{tpu_custom_call.1} parent=1 // pred_fallthru
      _
    // Predicated region
    $region54: #{tpu_custom_call.1} parent=1 // pred_check
      _
    $region55: #{tpu_custom_call.1} parent=1 // pred_check_branch
      %110 = sbr.rel (0) target = $region57
    $region56: #{tpu_custom_call.1} parent=1 // pred_region
      %111 = dma.done [#allocation7], 256
    $region57: #{tpu_custom_call.1} parent=1 // pred_fallthru
      _
    // Predicated region
    $region58: #{tpu_custom_call.1} parent=1 // pred_check
      _
    $region59: #{tpu_custom_call.1} parent=1 // pred_check_branch
      %113 = sbr.rel (0) target = $region61
    $region60: #{tpu_custom_call.1} parent=1 // pred_region
      %114 = dma.done [#allocation10], 512
    $region61: #{tpu_custom_call.1} parent=1 // pred_fallthru
      _
    // Predicated region
    $region62: #{tpu_custom_call.1} parent=1 // pred_check
      _
    $region63: #{tpu_custom_call.1} parent=1 // pred_check_branch
      %116 = sbr.rel (0) target = $region65
    $region64: #{tpu_custom_call.1} parent=1 // pred_region
      %117 = dma.done [#allocation10], 512
    $region65: #{tpu_custom_call.1} parent=1 // pred_fallthru
      _
    // Predicated region
    $region66: #{tpu_custom_call.1} parent=1 // pred_check
      _
    $region67: #{tpu_custom_call.1} parent=1 // pred_check_branch
      %119 = sbr.rel (0) target = $region69
    $region68: #{tpu_custom_call.1} parent=1 // pred_region
      %120 = dma.done [#allocation13], 512
    $region69: #{tpu_custom_call.1} parent=1 // pred_fallthru
      _
    %v121 = vld [vmem:[#allocation3] sm:$0xff]
    %v122 = vld [vmem:[#allocation3 + $0x8] sm:$0xff]
    %v123 = vld [vmem:[#allocation6] sm:$0xff]
    %v124 = vld [vmem:[#allocation6 + $0x8] sm:$0xff]
    %v125 = vld [vmem:[#allocation9] sm:$0xff]
    %v126 = vld [vmem:[#allocation9 + $0x8] sm:$0xff]
    %v127 = vld [vmem:[#allocation9 + $0x10] sm:$0xff]
    %v128 = vld [vmem:[#allocation9 + $0x18] sm:$0xff]
    %v129 = vld [vmem:[%s4] sm:$0x1]
    %v131 = vlaneseq
    %v132 = vshrl.u32 %v131, 7
    %v133 = vsub.s32 0, %v132
    %v134 = vrot.slane %v129, %v133
    %vm136 = vcmask 261120
    %v138 = vsel %vm136, %v123, 0
    %v141 = vsel %vm136, %v124, 0
    %143 = vmatprep.subr.mxu0 0.0
    %144 = vmatpush1.msra.mxu0 %v125
    %145 = vmatprep.subr.mxu0 0.0
    %146 = vmatpush1.msra.mxu0 %v126
    %147 = vmatprep.subr.mxu0 0.0
    %148 = vmatpush1.msra.mxu0 %v127
    %149 = vmatprep.subr.mxu0 0.0
    %150 = vmatpush1.msra.mxu0 %v128
    %151 = vmatprep.subr.mxu0 0.0
    %152 = vmatpush1.msra.mxu0 0.0
    %153 = vmatprep.subr.mxu0 0.0
    %154 = vmatpush1.msra.mxu0 0.0
    %155 = vmatprep.subr.mxu0 0.0
    %156 = vmatpush1.msra.mxu0 0.0
    %157 = vmatprep.subr.mxu0 0.0
    %158 = vmatpush1.msra.mxu0 0.0
    %159 = vmatprep.subr.mxu0 0.0
    %160 = vmatpush1.msra.mxu0 0.0
    %161 = vmatprep.subr.mxu0 0.0
    %162 = vmatpush1.msra.mxu0 0.0
    %163 = vmatprep.subr.mxu0 0.0
    %164 = vmatpush1.msra.mxu0 0.0
    %165 = vmatprep.subr.mxu0 0.0
    %166 = vmatpush1.msra.mxu0 0.0
    %167 = vmatprep.subr.mxu0 0.0
    %168 = vmatpush1.msra.mxu0 0.0
    %169 = vmatprep.subr.mxu0 0.0
    %170 = vmatpush1.msra.mxu0 0.0
    %171 = vmatprep.subr.mxu0 0.0
    %172 = vmatpush1.msra.mxu0 0.0
    %173 = vmatprep.subr.mxu0 0.0
    %174 = vmatpush1.msra.mxu0 0.0
    %175 = vmatprep.subr.mxu0 0.0
    %176 = vmatpush1.msra.mxu0 0.0
    %177 = vmatprep.subr.mxu0 0.0
    %178 = vmatpush1.msra.mxu0 0.0
    %179 = vmatprep.subr.mxu0 0.0
    %180 = vmatpush1.msra.mxu0 0.0
    %181 = vmatprep.subr.mxu0 0.0
    %182 = vmatpush1.msra.mxu0 0.0
    %183 = vmatprep.subr.mxu0 0.0
    %184 = vmatpush1.msra.mxu0 0.0
    %185 = vmatprep.subr.mxu0 0.0
    %186 = vmatpush1.msra.mxu0 0.0
    %187 = vmatprep.subr.mxu0 0.0
    %188 = vmatpush1.msra.mxu0 0.0
    %189 = vmatprep.subr.mxu0 0.0
    %190 = vmatpush1.msra.mxu0 0.0
    %191 = vmatprep.subr.mxu0 0.0
    %192 = vmatpush1.msra.mxu0 0.0
    %193 = vmatprep.subr.mxu0 0.0
    %194 = vmatpush1.msra.mxu0 0.0
    %195 = vmatprep.subr.mxu0 0.0
    %196 = vmatpush1.msra.mxu0 0.0
    %197 = vmatprep.subr.mxu0 0.0
    %198 = vmatpush1.msra.mxu0 0.0
    %199 = vmatprep.subr.mxu0 0.0
    %200 = vmatpush1.msra.mxu0 0.0
    %201 = vmatprep.subr.mxu0 0.0
    %202 = vmatpush1.msra.mxu0 0.0
    %203 = vmatprep.subr.mxu0 0.0
    %204 = vmatpush1.msra.mxu0 0.0
    %205 = vmatprep.subr.mxu0 0.0
    %206 = vmatpush1.msra.mxu0 0.0
    %207 = vmatprep.mubr.f32.mxu0 0.0
    %208 = vmatmul.mubr.f32.gmra.mrb[0].mxu0 %v138
    %v209 = vpop.f32.mrb[0].mxu0
    %v210 = vadd.f32 %v134, %v209
    %v211 = vpop.f32.mrb[0].mxu0
    %212 = vmatprep.mubr.f32.mxu0 0.0
    %213 = vmatmul.mubr.f32.gmra.mrb[0].mxu0 %v141
    %v214 = vpop.f32.mrb[0].mxu0
    %v215 = vadd.f32 %v134, %v214
    %v216 = vpop.f32.mrb[0].mxu0
    %217 = vdwg.mxu0
    %v218 = vld [vmem:[#allocation11] sm:$0xff]
    %v219 = vld [vmem:[#allocation11 + $0x8] sm:$0xff]
    %v220 = vld [vmem:[#allocation11 + $0x10] sm:$0xff]
    %v221 = vld [vmem:[#allocation11 + $0x18] sm:$0xff]
    %v222 = vld [vmem:[%s6] sm:$0x1]
    %v224 = vlaneseq
    %v225 = vshrl.u32 %v224, 7
    %v226 = vsub.s32 0, %v225
    %v227 = vrot.slane %v222, %v226
    %v230 = vsel %vm136, %v121, 0
    %v233 = vsel %vm136, %v122, 0
    %235 = vmatprep.subr.mxu0 0.0
    %236 = vmatpush1.msra.mxu0 %v218
    %237 = vmatprep.subr.mxu0 0.0
    %238 = vmatpush1.msra.mxu0 %v219
    %239 = vmatprep.subr.mxu0 0.0
    %240 = vmatpush1.msra.mxu0 %v220
    %241 = vmatprep.subr.mxu0 0.0
    %242 = vmatpush1.msra.mxu0 %v221
    %243 = vmatprep.subr.mxu0 0.0
    %244 = vmatpush1.msra.mxu0 0.0
    %245 = vmatprep.subr.mxu0 0.0
    %246 = vmatpush1.msra.mxu0 0.0
    %247 = vmatprep.subr.mxu0 0.0
    %248 = vmatpush1.msra.mxu0 0.0
    %249 = vmatprep.subr.mxu0 0.0
    %250 = vmatpush1.msra.mxu0 0.0
    %251 = vmatprep.subr.mxu0 0.0
    %252 = vmatpush1.msra.mxu0 0.0
    %253 = vmatprep.subr.mxu0 0.0
    %254 = vmatpush1.msra.mxu0 0.0
    %255 = vmatprep.subr.mxu0 0.0
    %256 = vmatpush1.msra.mxu0 0.0
    %257 = vmatprep.subr.mxu0 0.0
    %258 = vmatpush1.msra.mxu0 0.0
    %259 = vmatprep.subr.mxu0 0.0
    %260 = vmatpush1.msra.mxu0 0.0
    %261 = vmatprep.subr.mxu0 0.0
    %262 = vmatpush1.msra.mxu0 0.0
    %263 = vmatprep.subr.mxu0 0.0
    %264 = vmatpush1.msra.mxu0 0.0
    %265 = vmatprep.subr.mxu0 0.0
    %266 = vmatpush1.msra.mxu0 0.0
    %267 = vmatprep.subr.mxu0 0.0
    %268 = vmatpush1.msra.mxu0 0.0
    %269 = vmatprep.subr.mxu0 0.0
    %270 = vmatpush1.msra.mxu0 0.0
    %271 = vmatprep.subr.mxu0 0.0
    %272 = vmatpush1.msra.mxu0 0.0
    %273 = vmatprep.subr.mxu0 0.0
    %274 = vmatpush1.msra.mxu0 0.0
    %275 = vmatprep.subr.mxu0 0.0
    %276 = vmatpush1.msra.mxu0 0.0
    %277 = vmatprep.subr.mxu0 0.0
    %278 = vmatpush1.msra.mxu0 0.0
    %279 = vmatprep.subr.mxu0 0.0
    %280 = vmatpush1.msra.mxu0 0.0
    %281 = vmatprep.subr.mxu0 0.0
    %282 = vmatpush1.msra.mxu0 0.0
    %283 = vmatprep.subr.mxu0 0.0
    %284 = vmatpush1.msra.mxu0 0.0
    %285 = vmatprep.subr.mxu0 0.0
    %286 = vmatpush1.msra.mxu0 0.0
    %287 = vmatprep.subr.mxu0 0.0
    %288 = vmatpush1.msra.mxu0 0.0
    %289 = vmatprep.subr.mxu0 0.0
    %290 = vmatpush1.msra.mxu0 0.0
    %291 = vmatprep.subr.mxu0 0.0
    %292 = vmatpush1.msra.mxu0 0.0
    %293 = vmatprep.subr.mxu0 0.0
    %294 = vmatpush1.msra.mxu0 0.0
    %295 = vmatprep.subr.mxu0 0.0
    %296 = vmatpush1.msra.mxu0 0.0
    %297 = vmatprep.subr.mxu0 0.0
    %298 = vmatpush1.msra.mxu0 0.0
    %299 = vmatprep.mubr.f32.mxu0 0.0
    %300 = vmatmul.mubr.f32.gmra.mrb[0].mxu0 %v230
    %v301 = vpop.f32.mrb[0].mxu0
    %v302 = vadd.f32 %v227, %v301
    %v303 = vpop.f32.mrb[0].mxu0
    %304 = vmatprep.mubr.f32.mxu0 0.0
    %305 = vmatmul.mubr.f32.gmra.mrb[0].mxu0 %v233
    %v306 = vpop.f32.mrb[0].mxu0
    %v307 = vadd.f32 %v227, %v306
    %v308 = vpop.f32.mrb[0].mxu0
    %309 = vdwg.mxu0
    %v310 = vld [vmem:[#allocation8] sm:$0xff]
    %v311 = vld [vmem:[#allocation8 + $0x8] sm:$0xff]
    %vm312 = vcmask 31744
    %v314 = vsel %vm312, %v210, 0
    %v317 = vsel %vm312, %v215, 0
    %v320 = vsel %vm312, %v302, 0
    %v323 = vsel %vm312, %v307, 0
    %325 = vmatprep.subr.mxu0 0.0
    %326 = vmatpush1.xpose.msra.mxu0 %v320
    %327 = vmatprep.subr.mxu0 0.0
    %328 = vmatpush1.xpose.msra.mxu0 %v323
    %329 = vmatprep.subr.mxu0 0.0
    %330 = vmatpush1.xpose.msra.mxu0 0.0
    %331 = vmatprep.subr.mxu0 0.0
    %332 = vmatpush1.xpose.msra.mxu0 0.0
    %333 = vmatprep.subr.mxu0 0.0
    %334 = vmatpush1.xpose.msra.mxu0 0.0
    %335 = vmatprep.subr.mxu0 0.0
    %336 = vmatpush1.xpose.msra.mxu0 0.0
    %337 = vmatprep.subr.mxu0 0.0
    %338 = vmatpush1.xpose.msra.mxu0 0.0
    %339 = vmatprep.subr.mxu0 0.0
    %340 = vmatpush1.xpose.msra.mxu0 0.0
    %341 = vmatprep.subr.mxu0 0.0
    %342 = vmatpush1.xpose.msra.mxu0 0.0
    %343 = vmatprep.subr.mxu0 0.0
    %344 = vmatpush1.xpose.msra.mxu0 0.0
    %345 = vmatprep.subr.mxu0 0.0
    %346 = vmatpush1.xpose.msra.mxu0 0.0
    %347 = vmatprep.subr.mxu0 0.0
    %348 = vmatpush1.xpose.msra.mxu0 0.0
    %349 = vmatprep.subr.mxu0 0.0
    %350 = vmatpush1.xpose.msra.mxu0 0.0
    %351 = vmatprep.subr.mxu0 0.0
    %352 = vmatpush1.xpose.msra.mxu0 0.0
    %353 = vmatprep.subr.mxu0 0.0
    %354 = vmatpush1.xpose.msra.mxu0 0.0
    %355 = vmatprep.subr.mxu0 0.0
    %356 = vmatpush1.xpose.msra.mxu0 0.0
    %357 = vmatprep.subr.mxu0 0.0
    %358 = vmatpush1.xpose.msra.mxu0 0.0
    %359 = vmatprep.subr.mxu0 0.0
    %360 = vmatpush1.xpose.msra.mxu0 0.0
    %361 = vmatprep.subr.mxu0 0.0
    %362 = vmatpush1.xpose.msra.mxu0 0.0
    %363 = vmatprep.subr.mxu0 0.0
    %364 = vmatpush1.xpose.msra.mxu0 0.0
    %365 = vmatprep.subr.mxu0 0.0
    %366 = vmatpush1.xpose.msra.mxu0 0.0
    %367 = vmatprep.subr.mxu0 0.0
    %368 = vmatpush1.xpose.msra.mxu0 0.0
    %369 = vmatprep.subr.mxu0 0.0
    %370 = vmatpush1.xpose.msra.mxu0 0.0
    %371 = vmatprep.subr.mxu0 0.0
    %372 = vmatpush1.xpose.msra.mxu0 0.0
    %373 = vmatprep.subr.mxu0 0.0
    %374 = vmatpush1.xpose.msra.mxu0 0.0
    %375 = vmatprep.subr.mxu0 0.0
    %376 = vmatpush1.xpose.msra.mxu0 0.0
    %377 = vmatprep.subr.mxu0 0.0
    %378 = vmatpush1.xpose.msra.mxu0 0.0
    %379 = vmatprep.subr.mxu0 0.0
    %380 = vmatpush1.xpose.msra.mxu0 0.0
    %381 = vmatprep.subr.mxu0 0.0
    %382 = vmatpush1.xpose.msra.mxu0 0.0
    %383 = vmatprep.subr.mxu0 0.0
    %384 = vmatpush1.xpose.msra.mxu0 0.0
    %385 = vmatprep.subr.mxu0 0.0
    %386 = vmatpush1.xpose.msra.mxu0 0.0
    %387 = vmatprep.subr.mxu0 0.0
    %388 = vmatpush1.xpose.msra.mxu0 0.0
    %389 = vmatprep.mubr.f32.mxu0 0.0
    %390 = vmatmul.mubr.f32.gmra.mrb[0].mxu0 %v314
    %v391 = vpop.f32.mrb[0].mxu0
    %v392 = vadd.f32 %v310, %v391
    %v393 = vpop.f32.mrb[0].mxu0
    %394 = vmatprep.mubr.f32.mxu0 0.0
    %395 = vmatmul.mubr.f32.gmra.mrb[0].mxu0 %v317
    %v396 = vpop.f32.mrb[0].mxu0
    %v397 = vadd.f32 %v311, %v396
    %v398 = vpop.f32.mrb[0].mxu0
    %399 = vdwg.mxu0
    %vm400 = vcmask 130048
    %v401 = vsel %vm400, %v392, -inf
    %402 = vmax.xlane.f32.xlu0 %v401
    %v403 = vpop.xlane.xlu0 %402
    %v404 = vsel %vm400, %v397, -inf
    %405 = vmax.xlane.f32.xlu0 %v404
    %v406 = vpop.xlane.xlu0 %405
    %v407 = vsub.f32 %v392, %v403
    %v408 = vsub.f32 %v397, %v406
    %v409 = vmul.f32 %v407, 1.442695
    %v410 = vpow.pop %v409
    %v411 = vmul.f32 %v408, 1.442695
    %v412 = vpow.pop %v411
    %v413 = vsel %vm400, %v410, 0.0
    %414 = vadd.xlane.f32.xlu0 %v413
    %v415 = vpop.xlane.xlu0 %414
    %v416 = vsel %vm400, %v412, 0.0
    %417 = vadd.xlane.f32.xlu0 %v416
    %v418 = vpop.xlane.xlu0 %417
    %v419 = vrcp.pop %v415
    %v420 = vrcp.pop %v418
    %v421 = vmul.f32 %v410, %v419
    %v422 = vmul.f32 %v412, %v420
    %423 = vrot.lane.b32.xlu0 %v302, 96
    %v424 = vpop.permute.xlu0 %423
    %425 = vrot.lane.b32.xlu0 %v307, 96
    %v426 = vpop.permute.xlu0 %425
    %v430 = vsel %vm400, %v421, 0
    %v433 = vsel %vm400, %v422, 0
    %435 = vmatprep.subr.mxu0 0.0
    %436 = vmatpush1.msra.mxu0 %v424
    %437 = vmatprep.subr.mxu0 0.0
    %438 = vmatpush1.msra.mxu0 %v426
    %439 = vmatprep.subr.mxu0 0.0
    %440 = vmatpush1.msra.mxu0 0.0
    %441 = vmatprep.subr.mxu0 0.0
    %442 = vmatpush1.msra.mxu0 0.0
    %443 = vmatprep.subr.mxu0 0.0
    %444 = vmatpush1.msra.mxu0 0.0
    %445 = vmatprep.subr.mxu0 0.0
    %446 = vmatpush1.msra.mxu0 0.0
    %447 = vmatprep.subr.mxu0 0.0
    %448 = vmatpush1.msra.mxu0 0.0
    %449 = vmatprep.subr.mxu0 0.0
    %450 = vmatpush1.msra.mxu0 0.0
    %451 = vmatprep.subr.mxu0 0.0
    %452 = vmatpush1.msra.mxu0 0.0
    %453 = vmatprep.subr.mxu0 0.0
    %454 = vmatpush1.msra.mxu0 0.0
    %455 = vmatprep.subr.mxu0 0.0
    %456 = vmatpush1.msra.mxu0 0.0
    %457 = vmatprep.subr.mxu0 0.0
    %458 = vmatpush1.msra.mxu0 0.0
    %459 = vmatprep.subr.mxu0 0.0
    %460 = vmatpush1.msra.mxu0 0.0
    %461 = vmatprep.subr.mxu0 0.0
    %462 = vmatpush1.msra.mxu0 0.0
    %463 = vmatprep.subr.mxu0 0.0
    %464 = vmatpush1.msra.mxu0 0.0
    %465 = vmatprep.subr.mxu0 0.0
    %466 = vmatpush1.msra.mxu0 0.0
    %467 = vmatprep.subr.mxu0 0.0
    %468 = vmatpush1.msra.mxu0 0.0
    %469 = vmatprep.subr.mxu0 0.0
    %470 = vmatpush1.msra.mxu0 0.0
    %471 = vmatprep.subr.mxu0 0.0
    %472 = vmatpush1.msra.mxu0 0.0
    %473 = vmatprep.subr.mxu0 0.0
    %474 = vmatpush1.msra.mxu0 0.0
    %475 = vmatprep.subr.mxu0 0.0
    %476 = vmatpush1.msra.mxu0 0.0
    %477 = vmatprep.subr.mxu0 0.0
    %478 = vmatpush1.msra.mxu0 0.0
    %479 = vmatprep.subr.mxu0 0.0
    %480 = vmatpush1.msra.mxu0 0.0
    %481 = vmatprep.subr.mxu0 0.0
    %482 = vmatpush1.msra.mxu0 0.0
    %483 = vmatprep.subr.mxu0 0.0
    %484 = vmatpush1.msra.mxu0 0.0
    %485 = vmatprep.subr.mxu0 0.0
    %486 = vmatpush1.msra.mxu0 0.0
    %487 = vmatprep.subr.mxu0 0.0
    %488 = vmatpush1.msra.mxu0 0.0
    %489 = vmatprep.subr.mxu0 0.0
    %490 = vmatpush1.msra.mxu0 0.0
    %491 = vmatprep.subr.mxu0 0.0
    %492 = vmatpush1.msra.mxu0 0.0
    %493 = vmatprep.subr.mxu0 0.0
    %494 = vmatpush1.msra.mxu0 0.0
    %495 = vmatprep.subr.mxu0 0.0
    %496 = vmatpush1.msra.mxu0 0.0
    %497 = vmatprep.subr.mxu0 0.0
    %498 = vmatpush1.msra.mxu0 0.0
    %499 = vmatprep.mubr.f32.mxu0 0.0
    %500 = vmatmul.mubr.f32.gmra.mrb[0].mxu0 %v430
    %v501 = vpop.f32.mrb[0].mxu0
    %v502 = vadd.f32 0.0, %v501
    %v503 = vpop.f32.mrb[0].mxu0
    %504 = vmatprep.mubr.f32.mxu0 0.0
    %505 = vmatmul.mubr.f32.gmra.mrb[0].mxu0 %v433
    %v506 = vpop.f32.mrb[0].mxu0
    %v507 = vadd.f32 0.0, %v506
    %v508 = vpop.f32.mrb[0].mxu0
    %509 = vdwg.mxu0
    %510 = vst.msk [vmem:[#allocation2] sm:$0xff] %vm312, %v502
    %511 = vst.msk [vmem:[#allocation2 + $0x8] sm:$0xff] %vm312, %v507
    %512 = vrot.lane.b32.xlu0 %v210, 124
    %v513 = vpop.permute.xlu0 %512
    %514 = vrot.lane.b32.xlu0 %v215, 124
    %v515 = vpop.permute.xlu0 %514
    %516 = vrot.lane.b32.xlu0 %v302, 124
    %v517 = vpop.permute.xlu0 %516
    %518 = vrot.lane.b32.xlu0 %v307, 124
    %v519 = vpop.permute.xlu0 %518
    %v520 = vsel %vm312, %v513, 0
    %v522 = vsel %vm312, %v515, 0
    %v524 = vsel %vm312, %v517, 0
    %v526 = vsel %vm312, %v519, 0
    %528 = vmatprep.subr.mxu0 0.0
    %529 = vmatpush1.xpose.msra.mxu0 %v524
    %530 = vmatprep.subr.mxu0 0.0
    %531 = vmatpush1.xpose.msra.mxu0 %v526
    %532 = vmatprep.subr.mxu0 0.0
    %533 = vmatpush1.xpose.msra.mxu0 0.0
    %534 = vmatprep.subr.mxu0 0.0
    %535 = vmatpush1.xpose.msra.mxu0 0.0
    %536 = vmatprep.subr.mxu0 0.0
    %537 = vmatpush1.xpose.msra.mxu0 0.0
    %538 = vmatprep.subr.mxu0 0.0
    %539 = vmatpush1.xpose.msra.mxu0 0.0
    %540 = vmatprep.subr.mxu0 0.0
    %541 = vmatpush1.xpose.msra.mxu0 0.0
    %542 = vmatprep.subr.mxu0 0.0
    %543 = vmatpush1.xpose.msra.mxu0 0.0
    %544 = vmatprep.subr.mxu0 0.0
    %545 = vmatpush1.xpose.msra.mxu0 0.0
    %546 = vmatprep.subr.mxu0 0.0
    %547 = vmatpush1.xpose.msra.mxu0 0.0
    %548 = vmatprep.subr.mxu0 0.0
    %549 = vmatpush1.xpose.msra.mxu0 0.0
    %550 = vmatprep.subr.mxu0 0.0
    %551 = vmatpush1.xpose.msra.mxu0 0.0
    %552 = vmatprep.subr.mxu0 0.0
    %553 = vmatpush1.xpose.msra.mxu0 0.0
    %554 = vmatprep.subr.mxu0 0.0
    %555 = vmatpush1.xpose.msra.mxu0 0.0
    %556 = vmatprep.subr.mxu0 0.0
    %557 = vmatpush1.xpose.msra.mxu0 0.0
    %558 = vmatprep.subr.mxu0 0.0
    %559 = vmatpush1.xpose.msra.mxu0 0.0
    %560 = vmatprep.subr.mxu0 0.0
    %561 = vmatpush1.xpose.msra.mxu0 0.0
    %562 = vmatprep.subr.mxu0 0.0
    %563 = vmatpush1.xpose.msra.mxu0 0.0
    %564 = vmatprep.subr.mxu0 0.0
    %565 = vmatpush1.xpose.msra.mxu0 0.0
    %566 = vmatprep.subr.mxu0 0.0
    %567 = vmatpush1.xpose.msra.mxu0 0.0
    %568 = vmatprep.subr.mxu0 0.0
    %569 = vmatpush1.xpose.msra.mxu0 0.0
    %570 = vmatprep.subr.mxu0 0.0
    %571 = vmatpush1.xpose.msra.mxu0 0.0
    %572 = vmatprep.subr.mxu0 0.0
    %573 = vmatpush1.xpose.msra.mxu0 0.0
    %574 = vmatprep.subr.mxu0 0.0
    %575 = vmatpush1.xpose.msra.mxu0 0.0
    %576 = vmatprep.subr.mxu0 0.0
    %577 = vmatpush1.xpose.msra.mxu0 0.0
    %578 = vmatprep.subr.mxu0 0.0
    %579 = vmatpush1.xpose.msra.mxu0 0.0
    %580 = vmatprep.subr.mxu0 0.0
    %581 = vmatpush1.xpose.msra.mxu0 0.0
    %582 = vmatprep.subr.mxu0 0.0
    %583 = vmatpush1.xpose.msra.mxu0 0.0
    %584 = vmatprep.subr.mxu0 0.0
    %585 = vmatpush1.xpose.msra.mxu0 0.0
    %586 = vmatprep.subr.mxu0 0.0
    %587 = vmatpush1.xpose.msra.mxu0 0.0
    %588 = vmatprep.subr.mxu0 0.0
    %589 = vmatpush1.xpose.msra.mxu0 0.0
    %590 = vmatprep.subr.mxu0 0.0
    %591 = vmatpush1.xpose.msra.mxu0 0.0
    %592 = vmatprep.mubr.f32.mxu0 0.0
    %593 = vmatmul.mubr.f32.gmra.mrb[0].mxu0 %v520
    %v594 = vpop.f32.mrb[0].mxu0
    %v595 = vadd.f32 %v310, %v594
    %v596 = vpop.f32.mrb[0].mxu0
    %597 = vmatprep.mubr.f32.mxu0 0.0
    %598 = vmatmul.mubr.f32.gmra.mrb[0].mxu0 %v522
    %v599 = vpop.f32.mrb[0].mxu0
    %v600 = vadd.f32 %v311, %v599
    %v601 = vpop.f32.mrb[0].mxu0
    %602 = vdwg.mxu0
    %v603 = vsel %vm400, %v595, -inf
    %604 = vmax.xlane.f32.xlu0 %v603
    %v605 = vpop.xlane.xlu0 %604
    %v606 = vsel %vm400, %v600, -inf
    %607 = vmax.xlane.f32.xlu0 %v606
    %v608 = vpop.xlane.xlu0 %607
    %v609 = vsub.f32 %v595, %v605
    %v610 = vsub.f32 %v600, %v608
    %v611 = vmul.f32 %v609, 1.442695
    %v612 = vpow.pop %v611
    %v613 = vmul.f32 %v610, 1.442695
    %v614 = vpow.pop %v613
    %v615 = vsel %vm400, %v612, 0.0
    %616 = vadd.xlane.f32.xlu0 %v615
    %v617 = vpop.xlane.xlu0 %616
    %v618 = vsel %vm400, %v614, 0.0
    %619 = vadd.xlane.f32.xlu0 %v618
    %v620 = vpop.xlane.xlu0 %619
    %v621 = vrcp.pop %v617
    %v622 = vrcp.pop %v620
    %v623 = vmul.f32 %v612, %v621
    %v624 = vmul.f32 %v614, %v622
    %625 = vrot.lane.b32.xlu0 %v302, 92
    %v626 = vpop.permute.xlu0 %625
    %627 = vrot.lane.b32.xlu0 %v307, 92
    %v628 = vpop.permute.xlu0 %627
    %v632 = vsel %vm400, %v623, 0
    %v635 = vsel %vm400, %v624, 0
    %637 = vmatprep.subr.mxu0 0.0
    %638 = vmatpush1.msra.mxu0 %v626
    %639 = vmatprep.subr.mxu0 0.0
    %640 = vmatpush1.msra.mxu0 %v628
    %641 = vmatprep.subr.mxu0 0.0
    %642 = vmatpush1.msra.mxu0 0.0
    %643 = vmatprep.subr.mxu0 0.0
    %644 = vmatpush1.msra.mxu0 0.0
    %645 = vmatprep.subr.mxu0 0.0
    %646 = vmatpush1.msra.mxu0 0.0
    %647 = vmatprep.subr.mxu0 0.0
    %648 = vmatpush1.msra.mxu0 0.0
    %649 = vmatprep.subr.mxu0 0.0
    %650 = vmatpush1.msra.mxu0 0.0
    %651 = vmatprep.subr.mxu0 0.0
    %652 = vmatpush1.msra.mxu0 0.0
    %653 = vmatprep.subr.mxu0 0.0
    %654 = vmatpush1.msra.mxu0 0.0
    %655 = vmatprep.subr.mxu0 0.0
    %656 = vmatpush1.msra.mxu0 0.0
    %657 = vmatprep.subr.mxu0 0.0
    %658 = vmatpush1.msra.mxu0 0.0
    %659 = vmatprep.subr.mxu0 0.0
    %660 = vmatpush1.msra.mxu0 0.0
    %661 = vmatprep.subr.mxu0 0.0
    %662 = vmatpush1.msra.mxu0 0.0
    %663 = vmatprep.subr.mxu0 0.0
    %664 = vmatpush1.msra.mxu0 0.0
    %665 = vmatprep.subr.mxu0 0.0
    %666 = vmatpush1.msra.mxu0 0.0
    %667 = vmatprep.subr.mxu0 0.0
    %668 = vmatpush1.msra.mxu0 0.0
    %669 = vmatprep.subr.mxu0 0.0
    %670 = vmatpush1.msra.mxu0 0.0
    %671 = vmatprep.subr.mxu0 0.0
    %672 = vmatpush1.msra.mxu0 0.0
    %673 = vmatprep.subr.mxu0 0.0
    %674 = vmatpush1.msra.mxu0 0.0
    %675 = vmatprep.subr.mxu0 0.0
    %676 = vmatpush1.msra.mxu0 0.0
    %677 = vmatprep.subr.mxu0 0.0
    %678 = vmatpush1.msra.mxu0 0.0
    %679 = vmatprep.subr.mxu0 0.0
    %680 = vmatpush1.msra.mxu0 0.0
    %681 = vmatprep.subr.mxu0 0.0
    %682 = vmatpush1.msra.mxu0 0.0
    %683 = vmatprep.subr.mxu0 0.0
    %684 = vmatpush1.msra.mxu0 0.0
    %685 = vmatprep.subr.mxu0 0.0
    %686 = vmatpush1.msra.mxu0 0.0
    %687 = vmatprep.subr.mxu0 0.0
    %688 = vmatpush1.msra.mxu0 0.0
    %689 = vmatprep.subr.mxu0 0.0
    %690 = vmatpush1.msra.mxu0 0.0
    %691 = vmatprep.subr.mxu0 0.0
    %692 = vmatpush1.msra.mxu0 0.0
    %693 = vmatprep.subr.mxu0 0.0
    %694 = vmatpush1.msra.mxu0 0.0
    %695 = vmatprep.subr.mxu0 0.0
    %696 = vmatpush1.msra.mxu0 0.0
    %697 = vmatprep.subr.mxu0 0.0
    %698 = vmatpush1.msra.mxu0 0.0
    %699 = vmatprep.subr.mxu0 0.0
    %700 = vmatpush1.msra.mxu0 0.0
    %701 = vmatprep.mubr.f32.mxu0 0.0
    %702 = vmatmul.mubr.f32.gmra.mrb[0].mxu0 %v632
    %v703 = vpop.f32.mrb[0].mxu0
    %v704 = vadd.f32 0.0, %v703
    %v705 = vpop.f32.mrb[0].mxu0
    %706 = vmatprep.mubr.f32.mxu0 0.0
    %707 = vmatmul.mubr.f32.gmra.mrb[0].mxu0 %v635
    %v708 = vpop.f32.mrb[0].mxu0
    %v709 = vadd.f32 0.0, %v708
    %v710 = vpop.f32.mrb[0].mxu0
    %711 = vdwg.mxu0
    %714 = vrot.lane.b32.xlu0 %v704, 4
    %v715 = vpop.permute.xlu0 %714
    %716 = vrot.lane.b32.xlu0 %v709, 4
    %v717 = vpop.permute.xlu0 %716
    %vm720 = vcmask 64544
    %721 = vst.msk [vmem:[#allocation2] sm:$0xff] %vm720, %v715
    %722 = vst.msk [vmem:[#allocation2 + $0x8] sm:$0xff] %vm720, %v717
    %723 = vrot.lane.b32.xlu0 %v210, 120
    %v724 = vpop.permute.xlu0 %723
    %725 = vrot.lane.b32.xlu0 %v215, 120
    %v726 = vpop.permute.xlu0 %725
    %727 = vrot.lane.b32.xlu0 %v302, 120
    %v728 = vpop.permute.xlu0 %727
    %729 = vrot.lane.b32.xlu0 %v307, 120
    %v730 = vpop.permute.xlu0 %729
    %v731 = vsel %vm312, %v724, 0
    %v733 = vsel %vm312, %v726, 0
    %v735 = vsel %vm312, %v728, 0
    %v737 = vsel %vm312, %v730, 0
    %739 = vmatprep.subr.mxu0 0.0
    %740 = vmatpush1.xpose.msra.mxu0 %v735
    %741 = vmatprep.subr.mxu0 0.0
    %742 = vmatpush1.xpose.msra.mxu0 %v737
    %743 = vmatprep.subr.mxu0 0.0
    %744 = vmatpush1.xpose.msra.mxu0 0.0
    %745 = vmatprep.subr.mxu0 0.0
    %746 = vmatpush1.xpose.msra.mxu0 0.0
    %747 = vmatprep.subr.mxu0 0.0
    %748 = vmatpush1.xpose.msra.mxu0 0.0
    %749 = vmatprep.subr.mxu0 0.0
    %750 = vmatpush1.xpose.msra.mxu0 0.0
    %751 = vmatprep.subr.mxu0 0.0
    %752 = vmatpush1.xpose.msra.mxu0 0.0
    %753 = vmatprep.subr.mxu0 0.0
    %754 = vmatpush1.xpose.msra.mxu0 0.0
    %755 = vmatprep.subr.mxu0 0.0
    %756 = vmatpush1.xpose.msra.mxu0 0.0
    %757 = vmatprep.subr.mxu0 0.0
    %758 = vmatpush1.xpose.msra.mxu0 0.0
    %759 = vmatprep.subr.mxu0 0.0
    %760 = vmatpush1.xpose.msra.mxu0 0.0
    %761 = vmatprep.subr.mxu0 0.0
    %762 = vmatpush1.xpose.msra.mxu0 0.0
    %763 = vmatprep.subr.mxu0 0.0
    %764 = vmatpush1.xpose.msra.mxu0 0.0
    %765 = vmatprep.subr.mxu0 0.0
    %766 = vmatpush1.xpose.msra.mxu0 0.0
    %767 = vmatprep.subr.mxu0 0.0
    %768 = vmatpush1.xpose.msra.mxu0 0.0
    %769 = vmatprep.subr.mxu0 0.0
    %770 = vmatpush1.xpose.msra.mxu0 0.0
    %771 = vmatprep.subr.mxu0 0.0
    %772 = vmatpush1.xpose.msra.mxu0 0.0
    %773 = vmatprep.subr.mxu0 0.0
    %774 = vmatpush1.xpose.msra.mxu0 0.0
    %775 = vmatprep.subr.mxu0 0.0
    %776 = vmatpush1.xpose.msra.mxu0 0.0
    %777 = vmatprep.subr.mxu0 0.0
    %778 = vmatpush1.xpose.msra.mxu0 0.0
    %779 = vmatprep.subr.mxu0 0.0
    %780 = vmatpush1.xpose.msra.mxu0 0.0
    %781 = vmatprep.subr.mxu0 0.0
    %782 = vmatpush1.xpose.msra.mxu0 0.0
    %783 = vmatprep.subr.mxu0 0.0
    %784 = vmatpush1.xpose.msra.mxu0 0.0
    %785 = vmatprep.subr.mxu0 0.0
    %786 = vmatpush1.xpose.msra.mxu0 0.0
    %787 = vmatprep.subr.mxu0 0.0
    %788 = vmatpush1.xpose.msra.mxu0 0.0
    %789 = vmatprep.subr.mxu0 0.0
    %790 = vmatpush1.xpose.msra.mxu0 0.0
    %791 = vmatprep.subr.mxu0 0.0
    %792 = vmatpush1.xpose.msra.mxu0 0.0
    %793 = vmatprep.subr.mxu0 0.0
    %794 = vmatpush1.xpose.msra.mxu0 0.0
    %795 = vmatprep.subr.mxu0 0.0
    %796 = vmatpush1.xpose.msra.mxu0 0.0
    %797 = vmatprep.subr.mxu0 0.0
    %798 = vmatpush1.xpose.msra.mxu0 0.0
    %799 = vmatprep.subr.mxu0 0.0
    %800 = vmatpush1.xpose.msra.mxu0 0.0
    %801 = vmatprep.subr.mxu0 0.0
    %802 = vmatpush1.xpose.msra.mxu0 0.0
    %803 = vmatprep.mubr.f32.mxu0 0.0
    %804 = vmatmul.mubr.f32.gmra.mrb[0].mxu0 %v731
    %v805 = vpop.f32.mrb[0].mxu0
    %v806 = vadd.f32 %v310, %v805
    %v807 = vpop.f32.mrb[0].mxu0
    %808 = vmatprep.mubr.f32.mxu0 0.0
    %809 = vmatmul.mubr.f32.gmra.mrb[0].mxu0 %v733
    %v810 = vpop.f32.mrb[0].mxu0
    %v811 = vadd.f32 %v311, %v810
    %v812 = vpop.f32.mrb[0].mxu0
    %813 = vdwg.mxu0
    %v814 = vsel %vm400, %v806, -inf
    %815 = vmax.xlane.f32.xlu0 %v814
    %v816 = vpop.xlane.xlu0 %815
    %v817 = vsel %vm400, %v811, -inf
    %818 = vmax.xlane.f32.xlu0 %v817
    %v819 = vpop.xlane.xlu0 %818
    %v820 = vsub.f32 %v806, %v816
    %v821 = vsub.f32 %v811, %v819
    %v822 = vmul.f32 %v820, 1.442695
    %v823 = vpow.pop %v822
    %v824 = vmul.f32 %v821, 1.442695
    %v825 = vpow.pop %v824
    %v826 = vsel %vm400, %v823, 0.0
    %827 = vadd.xlane.f32.xlu0 %v826
    %v828 = vpop.xlane.xlu0 %827
    %v829 = vsel %vm400, %v825, 0.0
    %830 = vadd.xlane.f32.xlu0 %v829
    %v831 = vpop.xlane.xlu0 %830
    %v832 = vrcp.pop %v828
    %v833 = vrcp.pop %v831
    %v834 = vmul.f32 %v823, %v832
    %v835 = vmul.f32 %v825, %v833
    %836 = vrot.lane.b32.xlu0 %v302, 88
    %v837 = vpop.permute.xlu0 %836
    %838 = vrot.lane.b32.xlu0 %v307, 88
    %v839 = vpop.permute.xlu0 %838
    %v843 = vsel %vm400, %v834, 0
    %v846 = vsel %vm400, %v835, 0
    %848 = vmatprep.subr.mxu0 0.0
    %849 = vmatpush1.msra.mxu0 %v837
    %850 = vmatprep.subr.mxu0 0.0
    %851 = vmatpush1.msra.mxu0 %v839
    %852 = vmatprep.subr.mxu0 0.0
    %853 = vmatpush1.msra.mxu0 0.0
    %854 = vmatprep.subr.mxu0 0.0
    %855 = vmatpush1.msra.mxu0 0.0
    %856 = vmatprep.subr.mxu0 0.0
    %857 = vmatpush1.msra.mxu0 0.0
    %858 = vmatprep.subr.mxu0 0.0
    %859 = vmatpush1.msra.mxu0 0.0
    %860 = vmatprep.subr.mxu0 0.0
    %861 = vmatpush1.msra.mxu0 0.0
    %862 = vmatprep.subr.mxu0 0.0
    %863 = vmatpush1.msra.mxu0 0.0
    %864 = vmatprep.subr.mxu0 0.0
    %865 = vmatpush1.msra.mxu0 0.0
    %866 = vmatprep.subr.mxu0 0.0
    %867 = vmatpush1.msra.mxu0 0.0
    %868 = vmatprep.subr.mxu0 0.0
    %869 = vmatpush1.msra.mxu0 0.0
    %870 = vmatprep.subr.mxu0 0.0
    %871 = vmatpush1.msra.mxu0 0.0
    %872 = vmatprep.subr.mxu0 0.0
    %873 = vmatpush1.msra.mxu0 0.0
    %874 = vmatprep.subr.mxu0 0.0
    %875 = vmatpush1.msra.mxu0 0.0
    %876 = vmatprep.subr.mxu0 0.0
    %877 = vmatpush1.msra.mxu0 0.0
    %878 = vmatprep.subr.mxu0 0.0
    %879 = vmatpush1.msra.mxu0 0.0
    %880 = vmatprep.subr.mxu0 0.0
    %881 = vmatpush1.msra.mxu0 0.0
    %882 = vmatprep.subr.mxu0 0.0
    %883 = vmatpush1.msra.mxu0 0.0
    %884 = vmatprep.subr.mxu0 0.0
    %885 = vmatpush1.msra.mxu0 0.0
    %886 = vmatprep.subr.mxu0 0.0
    %887 = vmatpush1.msra.mxu0 0.0
    %888 = vmatprep.subr.mxu0 0.0
    %889 = vmatpush1.msra.mxu0 0.0
    %890 = vmatprep.subr.mxu0 0.0
    %891 = vmatpush1.msra.mxu0 0.0
    %892 = vmatprep.subr.mxu0 0.0
    %893 = vmatpush1.msra.mxu0 0.0
    %894 = vmatprep.subr.mxu0 0.0
    %895 = vmatpush1.msra.mxu0 0.0
    %896 = vmatprep.subr.mxu0 0.0
    %897 = vmatpush1.msra.mxu0 0.0
    %898 = vmatprep.subr.mxu0 0.0
    %899 = vmatpush1.msra.mxu0 0.0
    %900 = vmatprep.subr.mxu0 0.0
    %901 = vmatpush1.msra.mxu0 0.0
    %902 = vmatprep.subr.mxu0 0.0
    %903 = vmatpush1.msra.mxu0 0.0
    %904 = vmatprep.subr.mxu0 0.0
    %905 = vmatpush1.msra.mxu0 0.0
    %906 = vmatprep.subr.mxu0 0.0
    %907 = vmatpush1.msra.mxu0 0.0
    %908 = vmatprep.subr.mxu0 0.0
    %909 = vmatpush1.msra.mxu0 0.0
    %910 = vmatprep.subr.mxu0 0.0
    %911 = vmatpush1.msra.mxu0 0.0
    %912 = vmatprep.mubr.f32.mxu0 0.0
    %913 = vmatmul.mubr.f32.gmra.mrb[0].mxu0 %v843
    %v914 = vpop.f32.mrb[0].mxu0
    %v915 = vadd.f32 0.0, %v914
    %v916 = vpop.f32.mrb[0].mxu0
    %917 = vmatprep.mubr.f32.mxu0 0.0
    %918 = vmatmul.mubr.f32.gmra.mrb[0].mxu0 %v846
    %v919 = vpop.f32.mrb[0].mxu0
    %v920 = vadd.f32 0.0, %v919
    %v921 = vpop.f32.mrb[0].mxu0
    %922 = vdwg.mxu0
    %925 = vrot.lane.b32.xlu0 %v915, 8
    %v926 = vpop.permute.xlu0 %925
    %927 = vrot.lane.b32.xlu0 %v920, 8
    %v928 = vpop.permute.xlu0 %927
    %vm931 = vcmask 97344
    %932 = vst.msk [vmem:[#allocation2] sm:$0xff] %vm931, %v926
    %933 = vst.msk [vmem:[#allocation2 + $0x8] sm:$0xff] %vm931, %v928
    %934 = vrot.lane.b32.xlu0 %v210, 116
    %v935 = vpop.permute.xlu0 %934
    %936 = vrot.lane.b32.xlu0 %v215, 116
    %v937 = vpop.permute.xlu0 %936
    %938 = vrot.lane.b32.xlu0 %v302, 116
    %v939 = vpop.permute.xlu0 %938
    %940 = vrot.lane.b32.xlu0 %v307, 116
    %v941 = vpop.permute.xlu0 %940
    %v942 = vsel %vm312, %v935, 0
    %v944 = vsel %vm312, %v937, 0
    %v946 = vsel %vm312, %v939, 0
    %v948 = vsel %vm312, %v941, 0
    %950 = vmatprep.subr.mxu0 0.0
    %951 = vmatpush1.xpose.msra.mxu0 %v946
    %952 = vmatprep.subr.mxu0 0.0
    %953 = vmatpush1.xpose.msra.mxu0 %v948
    %954 = vmatprep.subr.mxu0 0.0
    %955 = vmatpush1.xpose.msra.mxu0 0.0
    %956 = vmatprep.subr.mxu0 0.0
    %957 = vmatpush1.xpose.msra.mxu0 0.0
    %958 = vmatprep.subr.mxu0 0.0
    %959 = vmatpush1.xpose.msra.mxu0 0.0
    %960 = vmatprep.subr.mxu0 0.0
    %961 = vmatpush1.xpose.msra.mxu0 0.0
    %962 = vmatprep.subr.mxu0 0.0
    %963 = vmatpush1.xpose.msra.mxu0 0.0
    %964 = vmatprep.subr.mxu0 0.0
    %965 = vmatpush1.xpose.msra.mxu0 0.0
    %966 = vmatprep.subr.mxu0 0.0
    %967 = vmatpush1.xpose.msra.mxu0 0.0
    %968 = vmatprep.subr.mxu0 0.0
    %969 = vmatpush1.xpose.msra.mxu0 0.0
    %970 = vmatprep.subr.mxu0 0.0
    %971 = vmatpush1.xpose.msra.mxu0 0.0
    %972 = vmatprep.subr.mxu0 0.0
    %973 = vmatpush1.xpose.msra.mxu0 0.0
    %974 = vmatprep.subr.mxu0 0.0
    %975 = vmatpush1.xpose.msra.mxu0 0.0
    %976 = vmatprep.subr.mxu0 0.0
    %977 = vmatpush1.xpose.msra.mxu0 0.0
    %978 = vmatprep.subr.mxu0 0.0
    %979 = vmatpush1.xpose.msra.mxu0 0.0
    %980 = vmatprep.subr.mxu0 0.0
    %981 = vmatpush1.xpose.msra.mxu0 0.0
    %982 = vmatprep.subr.mxu0 0.0
    %983 = vmatpush1.xpose.msra.mxu0 0.0
    %984 = vmatprep.subr.mxu0 0.0
    %985 = vmatpush1.xpose.msra.mxu0 0.0
    %986 = vmatprep.subr.mxu0 0.0
    %987 = vmatpush1.xpose.msra.mxu0 0.0
    %988 = vmatprep.subr.mxu0 0.0
    %989 = vmatpush1.xpose.msra.mxu0 0.0
    %990 = vmatprep.subr.mxu0 0.0
    %991 = vmatpush1.xpose.msra.mxu0 0.0
    %992 = vmatprep.subr.mxu0 0.0
    %993 = vmatpush1.xpose.msra.mxu0 0.0
    %994 = vmatprep.subr.mxu0 0.0
    %995 = vmatpush1.xpose.msra.mxu0 0.0
    %996 = vmatprep.subr.mxu0 0.0
    %997 = vmatpush1.xpose.msra.mxu0 0.0
    %998 = vmatprep.subr.mxu0 0.0
    %999 = vmatpush1.xpose.msra.mxu0 0.0
    %1000 = vmatprep.subr.mxu0 0.0
    %1001 = vmatpush1.xpose.msra.mxu0 0.0
    %1002 = vmatprep.subr.mxu0 0.0
    %1003 = vmatpush1.xpose.msra.mxu0 0.0
    %1004 = vmatprep.subr.mxu0 0.0
    %1005 = vmatpush1.xpose.msra.mxu0 0.0
    %1006 = vmatprep.subr.mxu0 0.0
    %1007 = vmatpush1.xpose.msra.mxu0 0.0
    %1008 = vmatprep.subr.mxu0 0.0
    %1009 = vmatpush1.xpose.msra.mxu0 0.0
    %1010 = vmatprep.subr.mxu0 0.0
    %1011 = vmatpush1.xpose.msra.mxu0 0.0
    %1012 = vmatprep.subr.mxu0 0.0
    %1013 = vmatpush1.xpose.msra.mxu0 0.0
    %1014 = vmatprep.mubr.f32.mxu0 0.0
    %1015 = vmatmul.mubr.f32.gmra.mrb[0].mxu0 %v942
    %v1016 = vpop.f32.mrb[0].mxu0
    %v1017 = vadd.f32 %v310, %v1016
    %v1018 = vpop.f32.mrb[0].mxu0
    %1019 = vmatprep.mubr.f32.mxu0 0.0
    %1020 = vmatmul.mubr.f32.gmra.mrb[0].mxu0 %v944
    %v1021 = vpop.f32.mrb[0].mxu0
    %v1022 = vadd.f32 %v311, %v1021
    %v1023 = vpop.f32.mrb[0].mxu0
    %1024 = vdwg.mxu0
    %v1025 = vsel %vm400, %v1017, -inf
    %1026 = vmax.xlane.f32.xlu0 %v1025
    %v1027 = vpop.xlane.xlu0 %1026
    %v1028 = vsel %vm400, %v1022, -inf
    %1029 = vmax.xlane.f32.xlu0 %v1028
    %v1030 = vpop.xlane.xlu0 %1029
    %v1031 = vsub.f32 %v1017, %v1027
    %v1032 = vsub.f32 %v1022, %v1030
    %v1033 = vmul.f32 %v1031, 1.442695
    %v1034 = vpow.pop %v1033
    %v1035 = vmul.f32 %v1032, 1.442695
    %v1036 = vpow.pop %v1035
    %v1037 = vsel %vm400, %v1034, 0.0
    %1038 = vadd.xlane.f32.xlu0 %v1037
    %v1039 = vpop.xlane.xlu0 %1038
    %v1040 = vsel %vm400, %v1036, 0.0
    %1041 = vadd.xlane.f32.xlu0 %v1040
    %v1042 = vpop.xlane.xlu0 %1041
    %v1043 = vrcp.pop %v1039
    %v1044 = vrcp.pop %v1042
    %v1045 = vmul.f32 %v1034, %v1043
    %v1046 = vmul.f32 %v1036, %v1044
    %1047 = vrot.lane.b32.xlu0 %v302, 84
    %v1048 = vpop.permute.xlu0 %1047
    %1049 = vrot.lane.b32.xlu0 %v307, 84
    %v1050 = vpop.permute.xlu0 %1049
    %v1054 = vsel %vm400, %v1045, 0
    %v1057 = vsel %vm400, %v1046, 0
    %1059 = vmatprep.subr.mxu0 0.0
    %1060 = vmatpush1.msra.mxu0 %v1048
    %1061 = vmatprep.subr.mxu0 0.0
    %1062 = vmatpush1.msra.mxu0 %v1050
    %1063 = vmatprep.subr.mxu0 0.0
    %1064 = vmatpush1.msra.mxu0 0.0
    %1065 = vmatprep.subr.mxu0 0.0
    %1066 = vmatpush1.msra.mxu0 0.0
    %1067 = vmatprep.subr.mxu0 0.0
    %1068 = vmatpush1.msra.mxu0 0.0
    %1069 = vmatprep.subr.mxu0 0.0
    %1070 = vmatpush1.msra.mxu0 0.0
    %1071 = vmatprep.subr.mxu0 0.0
    %1072 = vmatpush1.msra.mxu0 0.0
    %1073 = vmatprep.subr.mxu0 0.0
    %1074 = vmatpush1.msra.mxu0 0.0
    %1075 = vmatprep.subr.mxu0 0.0
    %1076 = vmatpush1.msra.mxu0 0.0
    %1077 = vmatprep.subr.mxu0 0.0
    %1078 = vmatpush1.msra.mxu0 0.0
    %1079 = vmatprep.subr.mxu0 0.0
    %1080 = vmatpush1.msra.mxu0 0.0
    %1081 = vmatprep.subr.mxu0 0.0
    %1082 = vmatpush1.msra.mxu0 0.0
    %1083 = vmatprep.subr.mxu0 0.0
    %1084 = vmatpush1.msra.mxu0 0.0
    %1085 = vmatprep.subr.mxu0 0.0
    %1086 = vmatpush1.msra.mxu0 0.0
    %1087 = vmatprep.subr.mxu0 0.0
    %1088 = vmatpush1.msra.mxu0 0.0
    %1089 = vmatprep.subr.mxu0 0.0
    %1090 = vmatpush1.msra.mxu0 0.0
    %1091 = vmatprep.subr.mxu0 0.0
    %1092 = vmatpush1.msra.mxu0 0.0
    %1093 = vmatprep.subr.mxu0 0.0
    %1094 = vmatpush1.msra.mxu0 0.0
    %1095 = vmatprep.subr.mxu0 0.0
    %1096 = vmatpush1.msra.mxu0 0.0
    %1097 = vmatprep.subr.mxu0 0.0
    %1098 = vmatpush1.msra.mxu0 0.0
    %1099 = vmatprep.subr.mxu0 0.0
    %1100 = vmatpush1.msra.mxu0 0.0
    %1101 = vmatprep.subr.mxu0 0.0
    %1102 = vmatpush1.msra.mxu0 0.0
    %1103 = vmatprep.subr.mxu0 0.0
    %1104 = vmatpush1.msra.mxu0 0.0
    %1105 = vmatprep.subr.mxu0 0.0
    %1106 = vmatpush1.msra.mxu0 0.0
    %1107 = vmatprep.subr.mxu0 0.0
    %1108 = vmatpush1.msra.mxu0 0.0
    %1109 = vmatprep.subr.mxu0 0.0
    %1110 = vmatpush1.msra.mxu0 0.0
    %1111 = vmatprep.subr.mxu0 0.0
    %1112 = vmatpush1.msra.mxu0 0.0
    %1113 = vmatprep.subr.mxu0 0.0
    %1114 = vmatpush1.msra.mxu0 0.0
    %1115 = vmatprep.subr.mxu0 0.0
    %1116 = vmatpush1.msra.mxu0 0.0
    %1117 = vmatprep.subr.mxu0 0.0
    %1118 = vmatpush1.msra.mxu0 0.0
    %1119 = vmatprep.subr.mxu0 0.0
    %1120 = vmatpush1.msra.mxu0 0.0
    %1121 = vmatprep.subr.mxu0 0.0
    %1122 = vmatpush1.msra.mxu0 0.0
    %1123 = vmatprep.mubr.f32.mxu0 0.0
    %1124 = vmatmul.mubr.f32.gmra.mrb[0].mxu0 %v1054
    %v1125 = vpop.f32.mrb[0].mxu0
    %v1126 = vadd.f32 0.0, %v1125
    %v1127 = vpop.f32.mrb[0].mxu0
    %1128 = vmatprep.mubr.f32.mxu0 0.0
    %1129 = vmatmul.mubr.f32.gmra.mrb[0].mxu0 %v1057
    %v1130 = vpop.f32.mrb[0].mxu0
    %v1131 = vadd.f32 0.0, %v1130
    %v1132 = vpop.f32.mrb[0].mxu0
    %1133 = vdwg.mxu0
    %1136 = vrot.lane.b32.xlu0 %v1126, 12
    %v1137 = vpop.permute.xlu0 %1136
    %1138 = vrot.lane.b32.xlu0 %v1131, 12
    %v1139 = vpop.permute.xlu0 %1138
    %vm1142 = vcmask 130144
    %1143 = vst.msk [vmem:[#allocation2] sm:$0xff] %vm1142, %v1137
    %1144 = vst.msk [vmem:[#allocation2 + $0x8] sm:$0xff] %vm1142, %v1139
    %1145 = vrot.lane.b32.xlu0 %v210, 112
    %v1146 = vpop.permute.xlu0 %1145
    %1147 = vrot.lane.b32.xlu0 %v215, 112
    %v1148 = vpop.permute.xlu0 %1147
    %1149 = vrot.lane.b32.xlu0 %v302, 112
    %v1150 = vpop.permute.xlu0 %1149
    %1151 = vrot.lane.b32.xlu0 %v307, 112
    %v1152 = vpop.permute.xlu0 %1151
    %v1153 = vsel %vm312, %v1146, 0
    %v1155 = vsel %vm312, %v1148, 0
    %v1157 = vsel %vm312, %v1150, 0
    %v1159 = vsel %vm312, %v1152, 0
    %1161 = vmatprep.subr.mxu0 0.0
    %1162 = vmatpush1.xpose.msra.mxu0 %v1157
    %1163 = vmatprep.subr.mxu0 0.0
    %1164 = vmatpush1.xpose.msra.mxu0 %v1159
    %1165 = vmatprep.subr.mxu0 0.0
    %1166 = vmatpush1.xpose.msra.mxu0 0.0
    %1167 = vmatprep.subr.mxu0 0.0
    %1168 = vmatpush1.xpose.msra.mxu0 0.0
    %1169 = vmatprep.subr.mxu0 0.0
    %1170 = vmatpush1.xpose.msra.mxu0 0.0
    %1171 = vmatprep.subr.mxu0 0.0
    %1172 = vmatpush1.xpose.msra.mxu0 0.0
    %1173 = vmatprep.subr.mxu0 0.0
    %1174 = vmatpush1.xpose.msra.mxu0 0.0
    %1175 = vmatprep.subr.mxu0 0.0
    %1176 = vmatpush1.xpose.msra.mxu0 0.0
    %1177 = vmatprep.subr.mxu0 0.0
    %1178 = vmatpush1.xpose.msra.mxu0 0.0
    %1179 = vmatprep.subr.mxu0 0.0
    %1180 = vmatpush1.xpose.msra.mxu0 0.0
    %1181 = vmatprep.subr.mxu0 0.0
    %1182 = vmatpush1.xpose.msra.mxu0 0.0
    %1183 = vmatprep.subr.mxu0 0.0
    %1184 = vmatpush1.xpose.msra.mxu0 0.0
    %1185 = vmatprep.subr.mxu0 0.0
    %1186 = vmatpush1.xpose.msra.mxu0 0.0
    %1187 = vmatprep.subr.mxu0 0.0
    %1188 = vmatpush1.xpose.msra.mxu0 0.0
    %1189 = vmatprep.subr.mxu0 0.0
    %1190 = vmatpush1.xpose.msra.mxu0 0.0
    %1191 = vmatprep.subr.mxu0 0.0
    %1192 = vmatpush1.xpose.msra.mxu0 0.0
    %1193 = vmatprep.subr.mxu0 0.0
    %1194 = vmatpush1.xpose.msra.mxu0 0.0
    %1195 = vmatprep.subr.mxu0 0.0
    %1196 = vmatpush1.xpose.msra.mxu0 0.0
    %1197 = vmatprep.subr.mxu0 0.0
    %1198 = vmatpush1.xpose.msra.mxu0 0.0
    %1199 = vmatprep.subr.mxu0 0.0
    %1200 = vmatpush1.xpose.msra.mxu0 0.0
    %1201 = vmatprep.subr.mxu0 0.0
    %1202 = vmatpush1.xpose.msra.mxu0 0.0
    %1203 = vmatprep.subr.mxu0 0.0
    %1204 = vmatpush1.xpose.msra.mxu0 0.0
    %1205 = vmatprep.subr.mxu0 0.0
    %1206 = vmatpush1.xpose.msra.mxu0 0.0
    %1207 = vmatprep.subr.mxu0 0.0
    %1208 = vmatpush1.xpose.msra.mxu0 0.0
    %1209 = vmatprep.subr.mxu0 0.0
    %1210 = vmatpush1.xpose.msra.mxu0 0.0
    %1211 = vmatprep.subr.mxu0 0.0
    %1212 = vmatpush1.xpose.msra.mxu0 0.0
    %1213 = vmatprep.subr.mxu0 0.0
    %1214 = vmatpush1.xpose.msra.mxu0 0.0
    %1215 = vmatprep.subr.mxu0 0.0
    %1216 = vmatpush1.xpose.msra.mxu0 0.0
    %1217 = vmatprep.subr.mxu0 0.0
    %1218 = vmatpush1.xpose.msra.mxu0 0.0
    %1219 = vmatprep.subr.mxu0 0.0
    %1220 = vmatpush1.xpose.msra.mxu0 0.0
    %1221 = vmatprep.subr.mxu0 0.0
    %1222 = vmatpush1.xpose.msra.mxu0 0.0
    %1223 = vmatprep.subr.mxu0 0.0
    %1224 = vmatpush1.xpose.msra.mxu0 0.0
    %1225 = vmatprep.mubr.f32.mxu0 0.0
    %1226 = vmatmul.mubr.f32.gmra.mrb[0].mxu0 %v1153
    %v1227 = vpop.f32.mrb[0].mxu0
    %v1228 = vadd.f32 %v310, %v1227
    %v1229 = vpop.f32.mrb[0].mxu0
    %1230 = vmatprep.mubr.f32.mxu0 0.0
    %1231 = vmatmul.mubr.f32.gmra.mrb[0].mxu0 %v1155
    %v1232 = vpop.f32.mrb[0].mxu0
    %v1233 = vadd.f32 %v311, %v1232
    %v1234 = vpop.f32.mrb[0].mxu0
    %1235 = vdwg.mxu0
    %v1236 = vsel %vm400, %v1228, -inf
    %1237 = vmax.xlane.f32.xlu0 %v1236
    %v1238 = vpop.xlane.xlu0 %1237
    %v1239 = vsel %vm400, %v1233, -inf
    %1240 = vmax.xlane.f32.xlu0 %v1239
    %v1241 = vpop.xlane.xlu0 %1240
    %v1242 = vsub.f32 %v1228, %v1238
    %v1243 = vsub.f32 %v1233, %v1241
    %v1244 = vmul.f32 %v1242, 1.442695
    %v1245 = vpow.pop %v1244
    %v1246 = vmul.f32 %v1243, 1.442695
    %v1247 = vpow.pop %v1246
    %v1248 = vsel %vm400, %v1245, 0.0
    %1249 = vadd.xlane.f32.xlu0 %v1248
    %v1250 = vpop.xlane.xlu0 %1249
    %v1251 = vsel %vm400, %v1247, 0.0
    %1252 = vadd.xlane.f32.xlu0 %v1251
    %v1253 = vpop.xlane.xlu0 %1252
    %v1254 = vrcp.pop %v1250
    %v1255 = vrcp.pop %v1253
    %v1256 = vmul.f32 %v1245, %v1254
    %v1257 = vmul.f32 %v1247, %v1255
    %1258 = vrot.lane.b32.xlu0 %v302, 80
    %v1259 = vpop.permute.xlu0 %1258
    %1260 = vrot.lane.b32.xlu0 %v307, 80
    %v1261 = vpop.permute.xlu0 %1260
    %v1265 = vsel %vm400, %v1256, 0
    %v1268 = vsel %vm400, %v1257, 0
    %1270 = vmatprep.subr.mxu0 0.0
    %1271 = vmatpush1.msra.mxu0 %v1259
    %1272 = vmatprep.subr.mxu0 0.0
    %1273 = vmatpush1.msra.mxu0 %v1261
    %1274 = vmatprep.subr.mxu0 0.0
    %1275 = vmatpush1.msra.mxu0 0.0
    %1276 = vmatprep.subr.mxu0 0.0
    %1277 = vmatpush1.msra.mxu0 0.0
    %1278 = vmatprep.subr.mxu0 0.0
    %1279 = vmatpush1.msra.mxu0 0.0
    %1280 = vmatprep.subr.mxu0 0.0
    %1281 = vmatpush1.msra.mxu0 0.0
    %1282 = vmatprep.subr.mxu0 0.0
    %1283 = vmatpush1.msra.mxu0 0.0
    %1284 = vmatprep.subr.mxu0 0.0
    %1285 = vmatpush1.msra.mxu0 0.0
    %1286 = vmatprep.subr.mxu0 0.0
    %1287 = vmatpush1.msra.mxu0 0.0
    %1288 = vmatprep.subr.mxu0 0.0
    %1289 = vmatpush1.msra.mxu0 0.0
    %1290 = vmatprep.subr.mxu0 0.0
    %1291 = vmatpush1.msra.mxu0 0.0
    %1292 = vmatprep.subr.mxu0 0.0
    %1293 = vmatpush1.msra.mxu0 0.0
    %1294 = vmatprep.subr.mxu0 0.0
    %1295 = vmatpush1.msra.mxu0 0.0
    %1296 = vmatprep.subr.mxu0 0.0
    %1297 = vmatpush1.msra.mxu0 0.0
    %1298 = vmatprep.subr.mxu0 0.0
    %1299 = vmatpush1.msra.mxu0 0.0
    %1300 = vmatprep.subr.mxu0 0.0
    %1301 = vmatpush1.msra.mxu0 0.0
    %1302 = vmatprep.subr.mxu0 0.0
    %1303 = vmatpush1.msra.mxu0 0.0
    %1304 = vmatprep.subr.mxu0 0.0
    %1305 = vmatpush1.msra.mxu0 0.0
    %1306 = vmatprep.subr.mxu0 0.0
    %1307 = vmatpush1.msra.mxu0 0.0
    %1308 = vmatprep.subr.mxu0 0.0
    %1309 = vmatpush1.msra.mxu0 0.0
    %1310 = vmatprep.subr.mxu0 0.0
    %1311 = vmatpush1.msra.mxu0 0.0
    %1312 = vmatprep.subr.mxu0 0.0
    %1313 = vmatpush1.msra.mxu0 0.0
    %1314 = vmatprep.subr.mxu0 0.0
    %1315 = vmatpush1.msra.mxu0 0.0
    %1316 = vmatprep.subr.mxu0 0.0
    %1317 = vmatpush1.msra.mxu0 0.0
    %1318 = vmatprep.subr.mxu0 0.0
    %1319 = vmatpush1.msra.mxu0 0.0
    %1320 = vmatprep.subr.mxu0 0.0
    %1321 = vmatpush1.msra.mxu0 0.0
    %1322 = vmatprep.subr.mxu0 0.0
    %1323 = vmatpush1.msra.mxu0 0.0
    %1324 = vmatprep.subr.mxu0 0.0
    %1325 = vmatpush1.msra.mxu0 0.0
    %1326 = vmatprep.subr.mxu0 0.0
    %1327 = vmatpush1.msra.mxu0 0.0
    %1328 = vmatprep.subr.mxu0 0.0
    %1329 = vmatpush1.msra.mxu0 0.0
    %1330 = vmatprep.subr.mxu0 0.0
    %1331 = vmatpush1.msra.mxu0 0.0
    %1332 = vmatprep.subr.mxu0 0.0
    %1333 = vmatpush1.msra.mxu0 0.0
    %1334 = vmatprep.mubr.f32.mxu0 0.0
    %1335 = vmatmul.mubr.f32.gmra.mrb[0].mxu0 %v1265
    %v1336 = vpop.f32.mrb[0].mxu0
    %v1337 = vadd.f32 0.0, %v1336
    %v1338 = vpop.f32.mrb[0].mxu0
    %1339 = vmatprep.mubr.f32.mxu0 0.0
    %1340 = vmatmul.mubr.f32.gmra.mrb[0].mxu0 %v1268
    %v1341 = vpop.f32.mrb[0].mxu0
    %v1342 = vadd.f32 0.0, %v1341
    %v1343 = vpop.f32.mrb[0].mxu0
    %1344 = vdwg.mxu0
    %1347 = vrot.lane.b32.xlu0 %v1337, 16
    %v1348 = vpop.permute.xlu0 %1347
    %1349 = vrot.lane.b32.xlu0 %v1342, 16
    %v1350 = vpop.permute.xlu0 %1349
    %vm1353 = vcmask 162944
    %1354 = vst.msk [vmem:[#allocation2] sm:$0xff] %vm1353, %v1348
    %1355 = vst.msk [vmem:[#allocation2 + $0x8] sm:$0xff] %vm1353, %v1350
    %1356 = vrot.lane.b32.xlu0 %v210, 108
    %v1357 = vpop.permute.xlu0 %1356
    %1358 = vrot.lane.b32.xlu0 %v215, 108
    %v1359 = vpop.permute.xlu0 %1358
    %1360 = vrot.lane.b32.xlu0 %v302, 108
    %v1361 = vpop.permute.xlu0 %1360
    %1362 = vrot.lane.b32.xlu0 %v307, 108
    %v1363 = vpop.permute.xlu0 %1362
    %v1364 = vsel %vm312, %v1357, 0
    %v1366 = vsel %vm312, %v1359, 0
    %v1368 = vsel %vm312, %v1361, 0
    %v1370 = vsel %vm312, %v1363, 0
    %1372 = vmatprep.subr.mxu0 0.0
    %1373 = vmatpush1.xpose.msra.mxu0 %v1368
    %1374 = vmatprep.subr.mxu0 0.0
    %1375 = vmatpush1.xpose.msra.mxu0 %v1370
    %1376 = vmatprep.subr.mxu0 0.0
    %1377 = vmatpush1.xpose.msra.mxu0 0.0
    %1378 = vmatprep.subr.mxu0 0.0
    %1379 = vmatpush1.xpose.msra.mxu0 0.0
    %1380 = vmatprep.subr.mxu0 0.0
    %1381 = vmatpush1.xpose.msra.mxu0 0.0
    %1382 = vmatprep.subr.mxu0 0.0
    %1383 = vmatpush1.xpose.msra.mxu0 0.0
    %1384 = vmatprep.subr.mxu0 0.0
    %1385 = vmatpush1.xpose.msra.mxu0 0.0
    %1386 = vmatprep.subr.mxu0 0.0
    %1387 = vmatpush1.xpose.msra.mxu0 0.0
    %1388 = vmatprep.subr.mxu0 0.0
    %1389 = vmatpush1.xpose.msra.mxu0 0.0
    %1390 = vmatprep.subr.mxu0 0.0
    %1391 = vmatpush1.xpose.msra.mxu0 0.0
    %1392 = vmatprep.subr.mxu0 0.0
    %1393 = vmatpush1.xpose.msra.mxu0 0.0
    %1394 = vmatprep.subr.mxu0 0.0
    %1395 = vmatpush1.xpose.msra.mxu0 0.0
    %1396 = vmatprep.subr.mxu0 0.0
    %1397 = vmatpush1.xpose.msra.mxu0 0.0
    %1398 = vmatprep.subr.mxu0 0.0
    %1399 = vmatpush1.xpose.msra.mxu0 0.0
    %1400 = vmatprep.subr.mxu0 0.0
    %1401 = vmatpush1.xpose.msra.mxu0 0.0
    %1402 = vmatprep.subr.mxu0 0.0
    %1403 = vmatpush1.xpose.msra.mxu0 0.0
    %1404 = vmatprep.subr.mxu0 0.0
    %1405 = vmatpush1.xpose.msra.mxu0 0.0
    %1406 = vmatprep.subr.mxu0 0.0
    %1407 = vmatpush1.xpose.msra.mxu0 0.0
    %1408 = vmatprep.subr.mxu0 0.0
    %1409 = vmatpush1.xpose.msra.mxu0 0.0
    %1410 = vmatprep.subr.mxu0 0.0
    %1411 = vmatpush1.xpose.msra.mxu0 0.0
    %1412 = vmatprep.subr.mxu0 0.0
    %1413 = vmatpush1.xpose.msra.mxu0 0.0
    %1414 = vmatprep.subr.mxu0 0.0
    %1415 = vmatpush1.xpose.msra.mxu0 0.0
    %1416 = vmatprep.subr.mxu0 0.0
    %1417 = vmatpush1.xpose.msra.mxu0 0.0
    %1418 = vmatprep.subr.mxu0 0.0
    %1419 = vmatpush1.xpose.msra.mxu0 0.0
    %1420 = vmatprep.subr.mxu0 0.0
    %1421 = vmatpush1.xpose.msra.mxu0 0.0
    %1422 = vmatprep.subr.mxu0 0.0
    %1423 = vmatpush1.xpose.msra.mxu0 0.0
    %1424 = vmatprep.subr.mxu0 0.0
    %1425 = vmatpush1.xpose.msra.mxu0 0.0
    %1426 = vmatprep.subr.mxu0 0.0
    %1427 = vmatpush1.xpose.msra.mxu0 0.0
    %1428 = vmatprep.subr.mxu0 0.0
    %1429 = vmatpush1.xpose.msra.mxu0 0.0
    %1430 = vmatprep.subr.mxu0 0.0
    %1431 = vmatpush1.xpose.msra.mxu0 0.0
    %1432 = vmatprep.subr.mxu0 0.0
    %1433 = vmatpush1.xpose.msra.mxu0 0.0
    %1434 = vmatprep.subr.mxu0 0.0
    %1435 = vmatpush1.xpose.msra.mxu0 0.0
    %1436 = vmatprep.mubr.f32.mxu0 0.0
    %1437 = vmatmul.mubr.f32.gmra.mrb[0].mxu0 %v1364
    %v1438 = vpop.f32.mrb[0].mxu0
    %v1439 = vadd.f32 %v310, %v1438
    %v1440 = vpop.f32.mrb[0].mxu0
    %1441 = vmatprep.mubr.f32.mxu0 0.0
    %1442 = vmatmul.mubr.f32.gmra.mrb[0].mxu0 %v1366
    %v1443 = vpop.f32.mrb[0].mxu0
    %v1444 = vadd.f32 %v311, %v1443
    %v1445 = vpop.f32.mrb[0].mxu0
    %1446 = vdwg.mxu0
    %v1447 = vsel %vm400, %v1439, -inf
    %1448 = vmax.xlane.f32.xlu0 %v1447
    %v1449 = vpop.xlane.xlu0 %1448
    %v1450 = vsel %vm400, %v1444, -inf
    %1451 = vmax.xlane.f32.xlu0 %v1450
    %v1452 = vpop.xlane.xlu0 %1451
    %v1453 = vsub.f32 %v1439, %v1449
    %v1454 = vsub.f32 %v1444, %v1452
    %v1455 = vmul.f32 %v1453, 1.442695
    %v1456 = vpow.pop %v1455
    %v1457 = vmul.f32 %v1454, 1.442695
    %v1458 = vpow.pop %v1457
    %v1459 = vsel %vm400, %v1456, 0.0
    %1460 = vadd.xlane.f32.xlu0 %v1459
    %v1461 = vpop.xlane.xlu0 %1460
    %v1462 = vsel %vm400, %v1458, 0.0
    %1463 = vadd.xlane.f32.xlu0 %v1462
    %v1464 = vpop.xlane.xlu0 %1463
    %v1465 = vrcp.pop %v1461
    %v1466 = vrcp.pop %v1464
    %v1467 = vmul.f32 %v1456, %v1465
    %v1468 = vmul.f32 %v1458, %v1466
    %1469 = vrot.lane.b32.xlu0 %v302, 76
    %v1470 = vpop.permute.xlu0 %1469
    %1471 = vrot.lane.b32.xlu0 %v307, 76
    %v1472 = vpop.permute.xlu0 %1471
    %v1476 = vsel %vm400, %v1467, 0
    %v1479 = vsel %vm400, %v1468, 0
    %1481 = vmatprep.subr.mxu0 0.0
    %1482 = vmatpush1.msra.mxu0 %v1470
    %1483 = vmatprep.subr.mxu0 0.0
    %1484 = vmatpush1.msra.mxu0 %v1472
    %1485 = vmatprep.subr.mxu0 0.0
    %1486 = vmatpush1.msra.mxu0 0.0
    %1487 = vmatprep.subr.mxu0 0.0
    %1488 = vmatpush1.msra.mxu0 0.0
    %1489 = vmatprep.subr.mxu0 0.0
    %1490 = vmatpush1.msra.mxu0 0.0
    %1491 = vmatprep.subr.mxu0 0.0
    %1492 = vmatpush1.msra.mxu0 0.0
    %1493 = vmatprep.subr.mxu0 0.0
    %1494 = vmatpush1.msra.mxu0 0.0
    %1495 = vmatprep.subr.mxu0 0.0
    %1496 = vmatpush1.msra.mxu0 0.0
    %1497 = vmatprep.subr.mxu0 0.0
    %1498 = vmatpush1.msra.mxu0 0.0
    %1499 = vmatprep.subr.mxu0 0.0
    %1500 = vmatpush1.msra.mxu0 0.0
    %1501 = vmatprep.subr.mxu0 0.0
    %1502 = vmatpush1.msra.mxu0 0.0
    %1503 = vmatprep.subr.mxu0 0.0
    %1504 = vmatpush1.msra.mxu0 0.0
    %1505 = vmatprep.subr.mxu0 0.0
    %1506 = vmatpush1.msra.mxu0 0.0
    %1507 = vmatprep.subr.mxu0 0.0
    %1508 = vmatpush1.msra.mxu0 0.0
    %1509 = vmatprep.subr.mxu0 0.0
    %1510 = vmatpush1.msra.mxu0 0.0
    %1511 = vmatprep.subr.mxu0 0.0
    %1512 = vmatpush1.msra.mxu0 0.0
    %1513 = vmatprep.subr.mxu0 0.0
    %1514 = vmatpush1.msra.mxu0 0.0
    %1515 = vmatprep.subr.mxu0 0.0
    %1516 = vmatpush1.msra.mxu0 0.0
    %1517 = vmatprep.subr.mxu0 0.0
    %1518 = vmatpush1.msra.mxu0 0.0
    %1519 = vmatprep.subr.mxu0 0.0
    %1520 = vmatpush1.msra.mxu0 0.0
    %1521 = vmatprep.subr.mxu0 0.0
    %1522 = vmatpush1.msra.mxu0 0.0
    %1523 = vmatprep.subr.mxu0 0.0
    %1524 = vmatpush1.msra.mxu0 0.0
    %1525 = vmatprep.subr.mxu0 0.0
    %1526 = vmatpush1.msra.mxu0 0.0
    %1527 = vmatprep.subr.mxu0 0.0
    %1528 = vmatpush1.msra.mxu0 0.0
    %1529 = vmatprep.subr.mxu0 0.0
    %1530 = vmatpush1.msra.mxu0 0.0
    %1531 = vmatprep.subr.mxu0 0.0
    %1532 = vmatpush1.msra.mxu0 0.0
    %1533 = vmatprep.subr.mxu0 0.0
    %1534 = vmatpush1.msra.mxu0 0.0
    %1535 = vmatprep.subr.mxu0 0.0
    %1536 = vmatpush1.msra.mxu0 0.0
    %1537 = vmatprep.subr.mxu0 0.0
    %1538 = vmatpush1.msra.mxu0 0.0
    %1539 = vmatprep.subr.mxu0 0.0
    %1540 = vmatpush1.msra.mxu0 0.0
    %1541 = vmatprep.subr.mxu0 0.0
    %1542 = vmatpush1.msra.mxu0 0.0
    %1543 = vmatprep.subr.mxu0 0.0
    %1544 = vmatpush1.msra.mxu0 0.0
    %1545 = vmatprep.mubr.f32.mxu0 0.0
    %1546 = vmatmul.mubr.f32.gmra.mrb[0].mxu0 %v1476
    %v1547 = vpop.f32.mrb[0].mxu0
    %v1548 = vadd.f32 0.0, %v1547
    %v1549 = vpop.f32.mrb[0].mxu0
    %1550 = vmatprep.mubr.f32.mxu0 0.0
    %1551 = vmatmul.mubr.f32.gmra.mrb[0].mxu0 %v1479
    %v1552 = vpop.f32.mrb[0].mxu0
    %v1553 = vadd.f32 0.0, %v1552
    %v1554 = vpop.f32.mrb[0].mxu0
    %1555 = vdwg.mxu0
    %1558 = vrot.lane.b32.xlu0 %v1548, 20
    %v1559 = vpop.permute.xlu0 %1558
    %1560 = vrot.lane.b32.xlu0 %v1553, 20
    %v1561 = vpop.permute.xlu0 %1560
    %vm1564 = vcmask 195744
    %1565 = vst.msk [vmem:[#allocation2] sm:$0xff] %vm1564, %v1559
    %1566 = vst.msk [vmem:[#allocation2 + $0x8] sm:$0xff] %vm1564, %v1561
    %1567 = vrot.lane.b32.xlu0 %v210, 104
    %v1568 = vpop.permute.xlu0 %1567
    %1569 = vrot.lane.b32.xlu0 %v215, 104
    %v1570 = vpop.permute.xlu0 %1569
    %1571 = vrot.lane.b32.xlu0 %v302, 104
    %v1572 = vpop.permute.xlu0 %1571
    %1573 = vrot.lane.b32.xlu0 %v307, 104
    %v1574 = vpop.permute.xlu0 %1573
    %v1575 = vsel %vm312, %v1568, 0
    %v1577 = vsel %vm312, %v1570, 0
    %v1579 = vsel %vm312, %v1572, 0
    %v1581 = vsel %vm312, %v1574, 0
    %1583 = vmatprep.subr.mxu0 0.0
    %1584 = vmatpush1.xpose.msra.mxu0 %v1579
    %1585 = vmatprep.subr.mxu0 0.0
    %1586 = vmatpush1.xpose.msra.mxu0 %v1581
    %1587 = vmatprep.subr.mxu0 0.0
    %1588 = vmatpush1.xpose.msra.mxu0 0.0
    %1589 = vmatprep.subr.mxu0 0.0
    %1590 = vmatpush1.xpose.msra.mxu0 0.0
    %1591 = vmatprep.subr.mxu0 0.0
    %1592 = vmatpush1.xpose.msra.mxu0 0.0
    %1593 = vmatprep.subr.mxu0 0.0
    %1594 = vmatpush1.xpose.msra.mxu0 0.0
    %1595 = vmatprep.subr.mxu0 0.0
    %1596 = vmatpush1.xpose.msra.mxu0 0.0
    %1597 = vmatprep.subr.mxu0 0.0
    %1598 = vmatpush1.xpose.msra.mxu0 0.0
    %1599 = vmatprep.subr.mxu0 0.0
    %1600 = vmatpush1.xpose.msra.mxu0 0.0
    %1601 = vmatprep.subr.mxu0 0.0
    %1602 = vmatpush1.xpose.msra.mxu0 0.0
    %1603 = vmatprep.subr.mxu0 0.0
    %1604 = vmatpush1.xpose.msra.mxu0 0.0
    %1605 = vmatprep.subr.mxu0 0.0
    %1606 = vmatpush1.xpose.msra.mxu0 0.0
    %1607 = vmatprep.subr.mxu0 0.0
    %1608 = vmatpush1.xpose.msra.mxu0 0.0
    %1609 = vmatprep.subr.mxu0 0.0
    %1610 = vmatpush1.xpose.msra.mxu0 0.0
    %1611 = vmatprep.subr.mxu0 0.0
    %1612 = vmatpush1.xpose.msra.mxu0 0.0
    %1613 = vmatprep.subr.mxu0 0.0
    %1614 = vmatpush1.xpose.msra.mxu0 0.0
    %1615 = vmatprep.subr.mxu0 0.0
    %1616 = vmatpush1.xpose.msra.mxu0 0.0
    %1617 = vmatprep.subr.mxu0 0.0
    %1618 = vmatpush1.xpose.msra.mxu0 0.0
    %1619 = vmatprep.subr.mxu0 0.0
    %1620 = vmatpush1.xpose.msra.mxu0 0.0
    %1621 = vmatprep.subr.mxu0 0.0
    %1622 = vmatpush1.xpose.msra.mxu0 0.0
    %1623 = vmatprep.subr.mxu0 0.0
    %1624 = vmatpush1.xpose.msra.mxu0 0.0
    %1625 = vmatprep.subr.mxu0 0.0
    %1626 = vmatpush1.xpose.msra.mxu0 0.0
    %1627 = vmatprep.subr.mxu0 0.0
    %1628 = vmatpush1.xpose.msra.mxu0 0.0
    %1629 = vmatprep.subr.mxu0 0.0
    %1630 = vmatpush1.xpose.msra.mxu0 0.0
    %1631 = vmatprep.subr.mxu0 0.0
    %1632 = vmatpush1.xpose.msra.mxu0 0.0
    %1633 = vmatprep.subr.mxu0 0.0
    %1634 = vmatpush1.xpose.msra.mxu0 0.0
    %1635 = vmatprep.subr.mxu0 0.0
    %1636 = vmatpush1.xpose.msra.mxu0 0.0
    %1637 = vmatprep.subr.mxu0 0.0
    %1638 = vmatpush1.xpose.msra.mxu0 0.0
    %1639 = vmatprep.subr.mxu0 0.0
    %1640 = vmatpush1.xpose.msra.mxu0 0.0
    %1641 = vmatprep.subr.mxu0 0.0
    %1642 = vmatpush1.xpose.msra.mxu0 0.0
    %1643 = vmatprep.subr.mxu0 0.0
    %1644 = vmatpush1.xpose.msra.mxu0 0.0
    %1645 = vmatprep.subr.mxu0 0.0
    %1646 = vmatpush1.xpose.msra.mxu0 0.0
    %1647 = vmatprep.mubr.f32.mxu0 0.0
    %1648 = vmatmul.mubr.f32.gmra.mrb[0].mxu0 %v1575
    %v1649 = vpop.f32.mrb[0].mxu0
    %v1650 = vadd.f32 %v310, %v1649
    %v1651 = vpop.f32.mrb[0].mxu0
    %1652 = vmatprep.mubr.f32.mxu0 0.0
    %1653 = vmatmul.mubr.f32.gmra.mrb[0].mxu0 %v1577
    %v1654 = vpop.f32.mrb[0].mxu0
    %v1655 = vadd.f32 %v311, %v1654
    %v1656 = vpop.f32.mrb[0].mxu0
    %1657 = vdwg.mxu0
    %v1658 = vsel %vm400, %v1650, -inf
    %1659 = vmax.xlane.f32.xlu0 %v1658
    %v1660 = vpop.xlane.xlu0 %1659
    %v1661 = vsel %vm400, %v1655, -inf
    %1662 = vmax.xlane.f32.xlu0 %v1661
    %v1663 = vpop.xlane.xlu0 %1662
    %v1664 = vsub.f32 %v1650, %v1660
    %v1665 = vsub.f32 %v1655, %v1663
    %v1666 = vmul.f32 %v1664, 1.442695
    %v1667 = vpow.pop %v1666
    %v1668 = vmul.f32 %v1665, 1.442695
    %v1669 = vpow.pop %v1668
    %v1670 = vsel %vm400, %v1667, 0.0
    %1671 = vadd.xlane.f32.xlu0 %v1670
    %v1672 = vpop.xlane.xlu0 %1671
    %v1673 = vsel %vm400, %v1669, 0.0
    %1674 = vadd.xlane.f32.xlu0 %v1673
    %v1675 = vpop.xlane.xlu0 %1674
    %v1676 = vrcp.pop %v1672
    %v1677 = vrcp.pop %v1675
    %v1678 = vmul.f32 %v1667, %v1676
    %v1679 = vmul.f32 %v1669, %v1677
    %1680 = vrot.lane.b32.xlu0 %v302, 72
    %v1681 = vpop.permute.xlu0 %1680
    %1682 = vrot.lane.b32.xlu0 %v307, 72
    %v1683 = vpop.permute.xlu0 %1682
    %v1687 = vsel %vm400, %v1678, 0
    %v1690 = vsel %vm400, %v1679, 0
    %1692 = vmatprep.subr.mxu0 0.0
    %1693 = vmatpush1.msra.mxu0 %v1681
    %1694 = vmatprep.subr.mxu0 0.0
    %1695 = vmatpush1.msra.mxu0 %v1683
    %1696 = vmatprep.subr.mxu0 0.0
    %1697 = vmatpush1.msra.mxu0 0.0
    %1698 = vmatprep.subr.mxu0 0.0
    %1699 = vmatpush1.msra.mxu0 0.0
    %1700 = vmatprep.subr.mxu0 0.0
    %1701 = vmatpush1.msra.mxu0 0.0
    %1702 = vmatprep.subr.mxu0 0.0
    %1703 = vmatpush1.msra.mxu0 0.0
    %1704 = vmatprep.subr.mxu0 0.0
    %1705 = vmatpush1.msra.mxu0 0.0
    %1706 = vmatprep.subr.mxu0 0.0
    %1707 = vmatpush1.msra.mxu0 0.0
    %1708 = vmatprep.subr.mxu0 0.0
    %1709 = vmatpush1.msra.mxu0 0.0
    %1710 = vmatprep.subr.mxu0 0.0
    %1711 = vmatpush1.msra.mxu0 0.0
    %1712 = vmatprep.subr.mxu0 0.0
    %1713 = vmatpush1.msra.mxu0 0.0
    %1714 = vmatprep.subr.mxu0 0.0
    %1715 = vmatpush1.msra.mxu0 0.0
    %1716 = vmatprep.subr.mxu0 0.0
    %1717 = vmatpush1.msra.mxu0 0.0
    %1718 = vmatprep.subr.mxu0 0.0
    %1719 = vmatpush1.msra.mxu0 0.0
    %1720 = vmatprep.subr.mxu0 0.0
    %1721 = vmatpush1.msra.mxu0 0.0
    %1722 = vmatprep.subr.mxu0 0.0
    %1723 = vmatpush1.msra.mxu0 0.0
    %1724 = vmatprep.subr.mxu0 0.0
    %1725 = vmatpush1.msra.mxu0 0.0
    %1726 = vmatprep.subr.mxu0 0.0
    %1727 = vmatpush1.msra.mxu0 0.0
    %1728 = vmatprep.subr.mxu0 0.0
    %1729 = vmatpush1.msra.mxu0 0.0
    %1730 = vmatprep.subr.mxu0 0.0
    %1731 = vmatpush1.msra.mxu0 0.0
    %1732 = vmatprep.subr.mxu0 0.0
    %1733 = vmatpush1.msra.mxu0 0.0
    %1734 = vmatprep.subr.mxu0 0.0
    %1735 = vmatpush1.msra.mxu0 0.0
    %1736 = vmatprep.subr.mxu0 0.0
    %1737 = vmatpush1.msra.mxu0 0.0
    %1738 = vmatprep.subr.mxu0 0.0
    %1739 = vmatpush1.msra.mxu0 0.0
    %1740 = vmatprep.subr.mxu0 0.0
    %1741 = vmatpush1.msra.mxu0 0.0
    %1742 = vmatprep.subr.mxu0 0.0
    %1743 = vmatpush1.msra.mxu0 0.0
    %1744 = vmatprep.subr.mxu0 0.0
    %1745 = vmatpush1.msra.mxu0 0.0
    %1746 = vmatprep.subr.mxu0 0.0
    %1747 = vmatpush1.msra.mxu0 0.0
    %1748 = vmatprep.subr.mxu0 0.0
    %1749 = vmatpush1.msra.mxu0 0.0
    %1750 = vmatprep.subr.mxu0 0.0
    %1751 = vmatpush1.msra.mxu0 0.0
    %1752 = vmatprep.subr.mxu0 0.0
    %1753 = vmatpush1.msra.mxu0 0.0
    %1754 = vmatprep.subr.mxu0 0.0
    %1755 = vmatpush1.msra.mxu0 0.0
    %1756 = vmatprep.mubr.f32.mxu0 0.0
    %1757 = vmatmul.mubr.f32.gmra.mrb[0].mxu0 %v1687
    %v1758 = vpop.f32.mrb[0].mxu0
    %v1759 = vadd.f32 0.0, %v1758
    %v1760 = vpop.f32.mrb[0].mxu0
    %1761 = vmatprep.mubr.f32.mxu0 0.0
    %1762 = vmatmul.mubr.f32.gmra.mrb[0].mxu0 %v1690
    %v1763 = vpop.f32.mrb[0].mxu0
    %v1764 = vadd.f32 0.0, %v1763
    %v1765 = vpop.f32.mrb[0].mxu0
    %1766 = vdwg.mxu0
    %1769 = vrot.lane.b32.xlu0 %v1759, 24
    %v1770 = vpop.permute.xlu0 %1769
    %1771 = vrot.lane.b32.xlu0 %v1764, 24
    %v1772 = vpop.permute.xlu0 %1771
    %vm1775 = vcmask 228544
    %1776 = vst.msk [vmem:[#allocation2] sm:$0xff] %vm1775, %v1770
    %1777 = vst.msk [vmem:[#allocation2 + $0x8] sm:$0xff] %vm1775, %v1772
    %1778 = vrot.lane.b32.xlu0 %v210, 100
    %v1779 = vpop.permute.xlu0 %1778
    %1780 = vrot.lane.b32.xlu0 %v215, 100
    %v1781 = vpop.permute.xlu0 %1780
    %1782 = vrot.lane.b32.xlu0 %v302, 100
    %v1783 = vpop.permute.xlu0 %1782
    %1784 = vrot.lane.b32.xlu0 %v307, 100
    %v1785 = vpop.permute.xlu0 %1784
    %v1786 = vsel %vm312, %v1779, 0
    %v1788 = vsel %vm312, %v1781, 0
    %v1790 = vsel %vm312, %v1783, 0
    %v1792 = vsel %vm312, %v1785, 0
    %1794 = vmatprep.subr.mxu0 0.0
    %1795 = vmatpush1.xpose.msra.mxu0 %v1790
    %1796 = vmatprep.subr.mxu0 0.0
    %1797 = vmatpush1.xpose.msra.mxu0 %v1792
    %1798 = vmatprep.subr.mxu0 0.0
    %1799 = vmatpush1.xpose.msra.mxu0 0.0
    %1800 = vmatprep.subr.mxu0 0.0
    %1801 = vmatpush1.xpose.msra.mxu0 0.0
    %1802 = vmatprep.subr.mxu0 0.0
    %1803 = vmatpush1.xpose.msra.mxu0 0.0
    %1804 = vmatprep.subr.mxu0 0.0
    %1805 = vmatpush1.xpose.msra.mxu0 0.0
    %1806 = vmatprep.subr.mxu0 0.0
    %1807 = vmatpush1.xpose.msra.mxu0 0.0
    %1808 = vmatprep.subr.mxu0 0.0
    %1809 = vmatpush1.xpose.msra.mxu0 0.0
    %1810 = vmatprep.subr.mxu0 0.0
    %1811 = vmatpush1.xpose.msra.mxu0 0.0
    %1812 = vmatprep.subr.mxu0 0.0
    %1813 = vmatpush1.xpose.msra.mxu0 0.0
    %1814 = vmatprep.subr.mxu0 0.0
    %1815 = vmatpush1.xpose.msra.mxu0 0.0
    %1816 = vmatprep.subr.mxu0 0.0
    %1817 = vmatpush1.xpose.msra.mxu0 0.0
    %1818 = vmatprep.subr.mxu0 0.0
    %1819 = vmatpush1.xpose.msra.mxu0 0.0
    %1820 = vmatprep.subr.mxu0 0.0
    %1821 = vmatpush1.xpose.msra.mxu0 0.0
    %1822 = vmatprep.subr.mxu0 0.0
    %1823 = vmatpush1.xpose.msra.mxu0 0.0
    %1824 = vmatprep.subr.mxu0 0.0
    %1825 = vmatpush1.xpose.msra.mxu0 0.0
    %1826 = vmatprep.subr.mxu0 0.0
    %1827 = vmatpush1.xpose.msra.mxu0 0.0
    %1828 = vmatprep.subr.mxu0 0.0
    %1829 = vmatpush1.xpose.msra.mxu0 0.0
    %1830 = vmatprep.subr.mxu0 0.0
    %1831 = vmatpush1.xpose.msra.mxu0 0.0
    %1832 = vmatprep.subr.mxu0 0.0
    %1833 = vmatpush1.xpose.msra.mxu0 0.0
    %1834 = vmatprep.subr.mxu0 0.0
    %1835 = vmatpush1.xpose.msra.mxu0 0.0
    %1836 = vmatprep.subr.mxu0 0.0
    %1837 = vmatpush1.xpose.msra.mxu0 0.0
    %1838 = vmatprep.subr.mxu0 0.0
    %1839 = vmatpush1.xpose.msra.mxu0 0.0
    %1840 = vmatprep.subr.mxu0 0.0
    %1841 = vmatpush1.xpose.msra.mxu0 0.0
    %1842 = vmatprep.subr.mxu0 0.0
    %1843 = vmatpush1.xpose.msra.mxu0 0.0
    %1844 = vmatprep.subr.mxu0 0.0
    %1845 = vmatpush1.xpose.msra.mxu0 0.0
    %1846 = vmatprep.subr.mxu0 0.0
    %1847 = vmatpush1.xpose.msra.mxu0 0.0
    %1848 = vmatprep.subr.mxu0 0.0
    %1849 = vmatpush1.xpose.msra.mxu0 0.0
    %1850 = vmatprep.subr.mxu0 0.0
    %1851 = vmatpush1.xpose.msra.mxu0 0.0
    %1852 = vmatprep.subr.mxu0 0.0
    %1853 = vmatpush1.xpose.msra.mxu0 0.0
    %1854 = vmatprep.subr.mxu0 0.0
    %1855 = vmatpush1.xpose.msra.mxu0 0.0
    %1856 = vmatprep.subr.mxu0 0.0
    %1857 = vmatpush1.xpose.msra.mxu0 0.0
    %1858 = vmatprep.mubr.f32.mxu0 0.0
    %1859 = vmatmul.mubr.f32.gmra.mrb[0].mxu0 %v1786
    %v1860 = vpop.f32.mrb[0].mxu0
    %v1861 = vadd.f32 %v310, %v1860
    %v1862 = vpop.f32.mrb[0].mxu0
    %1863 = vmatprep.mubr.f32.mxu0 0.0
    %1864 = vmatmul.mubr.f32.gmra.mrb[0].mxu0 %v1788
    %v1865 = vpop.f32.mrb[0].mxu0
    %v1866 = vadd.f32 %v311, %v1865
    %v1867 = vpop.f32.mrb[0].mxu0
    %1868 = vdwg.mxu0
    %v1869 = vsel %vm400, %v1861, -inf
    %1870 = vmax.xlane.f32.xlu0 %v1869
    %v1871 = vpop.xlane.xlu0 %1870
    %v1872 = vsel %vm400, %v1866, -inf
    %1873 = vmax.xlane.f32.xlu0 %v1872
    %v1874 = vpop.xlane.xlu0 %1873
    %v1875 = vsub.f32 %v1861, %v1871
    %v1876 = vsub.f32 %v1866, %v1874
    %v1877 = vmul.f32 %v1875, 1.442695
    %v1878 = vpow.pop %v1877
    %v1879 = vmul.f32 %v1876, 1.442695
    %v1880 = vpow.pop %v1879
    %v1881 = vsel %vm400, %v1878, 0.0
    %1882 = vadd.xlane.f32.xlu0 %v1881
    %v1883 = vpop.xlane.xlu0 %1882
    %v1884 = vsel %vm400, %v1880, 0.0
    %1885 = vadd.xlane.f32.xlu0 %v1884
    %v1886 = vpop.xlane.xlu0 %1885
    %v1887 = vrcp.pop %v1883
    %v1888 = vrcp.pop %v1886
    %v1889 = vmul.f32 %v1878, %v1887
    %v1890 = vmul.f32 %v1880, %v1888
    %1891 = vrot.lane.b32.xlu0 %v302, 68
    %v1892 = vpop.permute.xlu0 %1891
    %1893 = vrot.lane.b32.xlu0 %v307, 68
    %v1894 = vpop.permute.xlu0 %1893
    %v1898 = vsel %vm400, %v1889, 0
    %v1901 = vsel %vm400, %v1890, 0
    %1903 = vmatprep.subr.mxu0 0.0
    %1904 = vmatpush1.msra.mxu0 %v1892
    %1905 = vmatprep.subr.mxu0 0.0
    %1906 = vmatpush1.msra.mxu0 %v1894
    %1907 = vmatprep.subr.mxu0 0.0
    %1908 = vmatpush1.msra.mxu0 0.0
    %1909 = vmatprep.subr.mxu0 0.0
    %1910 = vmatpush1.msra.mxu0 0.0
    %1911 = vmatprep.subr.mxu0 0.0
    %1912 = vmatpush1.msra.mxu0 0.0
    %1913 = vmatprep.subr.mxu0 0.0
    %1914 = vmatpush1.msra.mxu0 0.0
    %1915 = vmatprep.subr.mxu0 0.0
    %1916 = vmatpush1.msra.mxu0 0.0
    %1917 = vmatprep.subr.mxu0 0.0
    %1918 = vmatpush1.msra.mxu0 0.0
    %1919 = vmatprep.subr.mxu0 0.0
    %1920 = vmatpush1.msra.mxu0 0.0
    %1921 = vmatprep.subr.mxu0 0.0
    %1922 = vmatpush1.msra.mxu0 0.0
    %1923 = vmatprep.subr.mxu0 0.0
    %1924 = vmatpush1.msra.mxu0 0.0
    %1925 = vmatprep.subr.mxu0 0.0
    %1926 = vmatpush1.msra.mxu0 0.0
    %1927 = vmatprep.subr.mxu0 0.0
    %1928 = vmatpush1.msra.mxu0 0.0
    %1929 = vmatprep.subr.mxu0 0.0
    %1930 = vmatpush1.msra.mxu0 0.0
    %1931 = vmatprep.subr.mxu0 0.0
    %1932 = vmatpush1.msra.mxu0 0.0
    %1933 = vmatprep.subr.mxu0 0.0
    %1934 = vmatpush1.msra.mxu0 0.0
    %1935 = vmatprep.subr.mxu0 0.0
    %1936 = vmatpush1.msra.mxu0 0.0
    %1937 = vmatprep.subr.mxu0 0.0
    %1938 = vmatpush1.msra.mxu0 0.0
    %1939 = vmatprep.subr.mxu0 0.0
    %1940 = vmatpush1.msra.mxu0 0.0
    %1941 = vmatprep.subr.mxu0 0.0
    %1942 = vmatpush1.msra.mxu0 0.0
    %1943 = vmatprep.subr.mxu0 0.0
    %1944 = vmatpush1.msra.mxu0 0.0
    %1945 = vmatprep.subr.mxu0 0.0
    %1946 = vmatpush1.msra.mxu0 0.0
    %1947 = vmatprep.subr.mxu0 0.0
    %1948 = vmatpush1.msra.mxu0 0.0
    %1949 = vmatprep.subr.mxu0 0.0
    %1950 = vmatpush1.msra.mxu0 0.0
    %1951 = vmatprep.subr.mxu0 0.0
    %1952 = vmatpush1.msra.mxu0 0.0
    %1953 = vmatprep.subr.mxu0 0.0
    %1954 = vmatpush1.msra.mxu0 0.0
    %1955 = vmatprep.subr.mxu0 0.0
    %1956 = vmatpush1.msra.mxu0 0.0
    %1957 = vmatprep.subr.mxu0 0.0
    %1958 = vmatpush1.msra.mxu0 0.0
    %1959 = vmatprep.subr.mxu0 0.0
    %1960 = vmatpush1.msra.mxu0 0.0
    %1961 = vmatprep.subr.mxu0 0.0
    %1962 = vmatpush1.msra.mxu0 0.0
    %1963 = vmatprep.subr.mxu0 0.0
    %1964 = vmatpush1.msra.mxu0 0.0
    %1965 = vmatprep.subr.mxu0 0.0
    %1966 = vmatpush1.msra.mxu0 0.0
    %1967 = vmatprep.mubr.f32.mxu0 0.0
    %1968 = vmatmul.mubr.f32.gmra.mrb[0].mxu0 %v1898
    %v1969 = vpop.f32.mrb[0].mxu0
    %v1970 = vadd.f32 0.0, %v1969
    %v1971 = vpop.f32.mrb[0].mxu0
    %1972 = vmatprep.mubr.f32.mxu0 0.0
    %1973 = vmatmul.mubr.f32.gmra.mrb[0].mxu0 %v1901
    %v1974 = vpop.f32.mrb[0].mxu0
    %v1975 = vadd.f32 0.0, %v1974
    %v1976 = vpop.f32.mrb[0].mxu0
    %1977 = vdwg.mxu0
    %1980 = vrot.lane.b32.xlu0 %v1970, 28
    %v1981 = vpop.permute.xlu0 %1980
    %1982 = vrot.lane.b32.xlu0 %v1975, 28
    %v1983 = vpop.permute.xlu0 %1982
    %vm1986 = vcmask 261344
    %1987 = vst.msk [vmem:[#allocation2] sm:$0xff] %vm1986, %v1981
    %1988 = vst.msk [vmem:[#allocation2 + $0x8] sm:$0xff] %vm1986, %v1983
    %v1989 = vld [vmem:[#allocation2] sm:$0xff]
    %v1990 = vld [vmem:[#allocation2 + $0x8] sm:$0xff]
    %v1991 = vld [vmem:[#allocation12] sm:$0xff]
    %v1992 = vld [vmem:[#allocation12 + $0x8] sm:$0xff]
    %v1993 = vld [vmem:[#allocation12 + $0x10] sm:$0xff]
    %v1994 = vld [vmem:[#allocation12 + $0x18] sm:$0xff]
    %v1995 = vld [vmem:[%s8] sm:$0x1]
    %v1997 = vlaneseq
    %v1998 = vshrl.u32 %v1997, 7
    %v1999 = vsub.s32 0, %v1998
    %v2000 = vrot.slane %v1995, %v1999
    %v2003 = vsel %vm136, %v1989, 0
    %v2006 = vsel %vm136, %v1990, 0
    %2008 = vmatprep.subr.mxu0 0.0
    %2009 = vmatpush1.msra.mxu0 %v1991
    %2010 = vmatprep.subr.mxu0 0.0
    %2011 = vmatpush1.msra.mxu0 %v1992
    %2012 = vmatprep.subr.mxu0 0.0
    %2013 = vmatpush1.msra.mxu0 %v1993
    %2014 = vmatprep.subr.mxu0 0.0
    %2015 = vmatpush1.msra.mxu0 %v1994
    %2016 = vmatprep.subr.mxu0 0.0
    %2017 = vmatpush1.msra.mxu0 0.0
    %2018 = vmatprep.subr.mxu0 0.0
    %2019 = vmatpush1.msra.mxu0 0.0
    %2020 = vmatprep.subr.mxu0 0.0
    %2021 = vmatpush1.msra.mxu0 0.0
    %2022 = vmatprep.subr.mxu0 0.0
    %2023 = vmatpush1.msra.mxu0 0.0
    %2024 = vmatprep.subr.mxu0 0.0
    %2025 = vmatpush1.msra.mxu0 0.0
    %2026 = vmatprep.subr.mxu0 0.0
    %2027 = vmatpush1.msra.mxu0 0.0
    %2028 = vmatprep.subr.mxu0 0.0
    %2029 = vmatpush1.msra.mxu0 0.0
    %2030 = vmatprep.subr.mxu0 0.0
    %2031 = vmatpush1.msra.mxu0 0.0
    %2032 = vmatprep.subr.mxu0 0.0
    %2033 = vmatpush1.msra.mxu0 0.0
    %2034 = vmatprep.subr.mxu0 0.0
    %2035 = vmatpush1.msra.mxu0 0.0
    %2036 = vmatprep.subr.mxu0 0.0
    %2037 = vmatpush1.msra.mxu0 0.0
    %2038 = vmatprep.subr.mxu0 0.0
    %2039 = vmatpush1.msra.mxu0 0.0
    %2040 = vmatprep.subr.mxu0 0.0
    %2041 = vmatpush1.msra.mxu0 0.0
    %2042 = vmatprep.subr.mxu0 0.0
    %2043 = vmatpush1.msra.mxu0 0.0
    %2044 = vmatprep.subr.mxu0 0.0
    %2045 = vmatpush1.msra.mxu0 0.0
    %2046 = vmatprep.subr.mxu0 0.0
    %2047 = vmatpush1.msra.mxu0 0.0
    %2048 = vmatprep.subr.mxu0 0.0
    %2049 = vmatpush1.msra.mxu0 0.0
    %2050 = vmatprep.subr.mxu0 0.0
    %2051 = vmatpush1.msra.mxu0 0.0
    %2052 = vmatprep.subr.mxu0 0.0
    %2053 = vmatpush1.msra.mxu0 0.0
    %2054 = vmatprep.subr.mxu0 0.0
    %2055 = vmatpush1.msra.mxu0 0.0
    %2056 = vmatprep.subr.mxu0 0.0
    %2057 = vmatpush1.msra.mxu0 0.0
    %2058 = vmatprep.subr.mxu0 0.0
    %2059 = vmatpush1.msra.mxu0 0.0
    %2060 = vmatprep.subr.mxu0 0.0
    %2061 = vmatpush1.msra.mxu0 0.0
    %2062 = vmatprep.subr.mxu0 0.0
    %2063 = vmatpush1.msra.mxu0 0.0
    %2064 = vmatprep.subr.mxu0 0.0
    %2065 = vmatpush1.msra.mxu0 0.0
    %2066 = vmatprep.subr.mxu0 0.0
    %2067 = vmatpush1.msra.mxu0 0.0
    %2068 = vmatprep.subr.mxu0 0.0
    %2069 = vmatpush1.msra.mxu0 0.0
    %2070 = vmatprep.subr.mxu0 0.0
    %2071 = vmatpush1.msra.mxu0 0.0
    %2072 = vmatprep.mubr.f32.mxu0 0.0
    %2073 = vmatmul.mubr.f32.gmra.mrb[0].mxu0 %v2003
    %v2074 = vpop.f32.mrb[0].mxu0
    %v2075 = vadd.f32 %v2000, %v2074
    %v2076 = vpop.f32.mrb[0].mxu0
    %2077 = vmatprep.mubr.f32.mxu0 0.0
    %2078 = vmatmul.mubr.f32.gmra.mrb[0].mxu0 %v2006
    %v2079 = vpop.f32.mrb[0].mxu0
    %v2080 = vadd.f32 %v2000, %v2079
    %v2081 = vpop.f32.mrb[0].mxu0
    %2082 = vdwg.mxu0
    %v2083 = vadd.f32 %v2075, %v121
    %v2084 = vadd.f32 %v2080, %v122
    %v2085 = vsel %vm136, %v2083, 0.0
    %2086 = vadd.xlane.f32.xlu0 %v2085
    %v2087 = vpop.xlane.xlu0 %2086
    %v2088 = vsel %vm136, %v2084, 0.0
    %2089 = vadd.xlane.f32.xlu0 %v2088
    %v2090 = vpop.xlane.xlu0 %2089
    %v2091 = vrcp.pop 32.0
    %v2092 = vmul.f32 %v2087, %v2091
    %v2093 = vmul.f32 %v2090, %v2091
    %v2094 = vsub.f32 %v2083, %v2092
    %v2095 = vsub.f32 %v2084, %v2093
    %v2096 = vmul.f32 %v2094, %v2094
    %v2097 = vmul.f32 %v2095, %v2095
    %v2098 = vsel %vm136, %v2096, 0.0
    %2099 = vadd.xlane.f32.xlu0 %v2098
    %v2100 = vpop.xlane.xlu0 %2099
    %v2101 = vsel %vm136, %v2097, 0.0
    %2102 = vadd.xlane.f32.xlu0 %v2101
    %v2103 = vpop.xlane.xlu0 %2102
    %v2104 = vmul.f32 %v2100, %v2091
    %v2105 = vmul.f32 %v2103, %v2091
    %v2106 = vadd.f32 %v2104, 1e-05
    %v2107 = vadd.f32 %v2105, 1e-05
    %v2108 = vrsqrt.pop %v2106
    %v2109 = vrsqrt.pop %v2107
    %v2110 = vmul.f32 %v2094, %v2108
    %v2111 = vmul.f32 %v2095, %v2109
    %v2112 = vld [vmem:[%s9] sm:$0x1]
    %v2114 = vlaneseq
    %v2115 = vshrl.u32 %v2114, 7
    %v2116 = vsub.s32 0, %v2115
    %v2117 = vrot.slane %v2112, %v2116
    %v2119 = vmul.f32 %v2110, %v2117
    %v2120 = vmul.f32 %v2111, %v2117
    %v2121 = vld [vmem:[%s10] sm:$0x1]
    %v2123 = vlaneseq
    %v2124 = vshrl.u32 %v2123, 7
    %v2125 = vsub.s32 0, %v2124
    %v2126 = vrot.slane %v2121, %v2125
    %v2128 = vadd.f32 %v2119, %v2126
    %v2129 = vadd.f32 %v2120, %v2126
    %2130 = vst.msk [vmem:[#allocation14] sm:$0xff] %vm136, %v2128
    %2131 = vst.msk [vmem:[#allocation14 + $0x8] sm:$0xff] %vm136, %v2129
    // Predicated region
    $region70: #{tpu_custom_call.1} parent=1 // pred_check
      _
    $region71: #{tpu_custom_call.1} parent=1 // pred_check_branch
      %2133 = sbr.rel (0) target = $region73
    $region72: #{tpu_custom_call.1} parent=1 // pred_region
      %s2135 = ssub.s32 256, 256
      %2136 = vsyncadd [#allocation5], %s2135
      %s2137 = sshll.u32 [#allocation14], 4
      %s2138 = int_to_ptr.vmem [resolvable:$true] %s2137
      %2143 = dma.vmem_to_hbm [thread:$0]  %s2138, 256, %s11, [#allocation5], 128, 128, 8
    $region73: #{tpu_custom_call.1} parent=1 // pred_fallthru
      _
    // Predicated region
    $region74: #{tpu_custom_call.1} parent=1 // pred_check
      _
    $region75: #{tpu_custom_call.1} parent=1 // pred_check_branch
      %2145 = sbr.rel (0) target = $region77
    $region76: #{tpu_custom_call.1} parent=1 // pred_region
      %2146 = dma.done [#allocation5], 256
    $region77: #{tpu_custom_call.1} parent=1 // pred_fallthru
      _
    %2147 = vsyncpa [#allocation4], 1
    %2148 = vsyncpa [#allocation7], 1
    %2149 = vsyncpa [#allocation10], 1
    %2150 = vsyncpa [#allocation13], 1
    %2151 = vsyncpa [#allocation5], 1

</llo_original>
